<compile_context>
chip_gen: v6e
topology: v6e:2x2x1
jax: 0.10.0
libtpu: 0.0.40
codegen_flags: <defaults>
</compile_context>

<pallas_src>
import jax
import jax.numpy as jnp
from jax.experimental import pallas as pl
from jax.experimental.pallas import tpu as pltpu

EPS = 1e-5


def _adaattn_kernel(q_ref, k_ref, v_ref, ct_ref, cmean_ref, cistd_ref,
                    o_ref,
                    m_scr, l_scr, acc1_scr, acc2_scr):
    """One (batch, q-tile, kv-tile) grid step.

    q_ref  : (1, Tq, Ck)   projected content_key tile, spatial-major (F^T)
    k_ref  : (1, Tk, Ck)   projected style_key tile,   spatial-major (G^T)
    v_ref  : (1, Cin, Tk)  projected style tile,       channel-major (H)
    ct_ref : (1, Cin, Tq)  raw content tile (f32),     channel-major
    cmean_ref / cistd_ref : (1, Cin, 1) full-extent content stats (f32)
    o_ref  : (1, Cin, Tq)  lane-dense output store
    Scratch (all f32): m/l (1, Tq) running max / sum; acc1/acc2 (Cin, Tq)
    running un-normalised sum(P*V) and sum(P*V^2).
    """
    ks = pl.program_id(2)

    @pl.when(ks == 0)
    def _init():
        m_scr[...] = jnp.full_like(m_scr, -jnp.inf)
        l_scr[...] = jnp.zeros_like(l_scr)
        acc1_scr[...] = jnp.zeros_like(acc1_scr)
        acc2_scr[...] = jnp.zeros_like(acc2_scr)

    # Attention logits with keys on sublanes / queries on lanes:
    #   s[k, q] = sum_c K[k, c] * Q[q, c]   (NT dot, bf16 operands, f32 acc).
    s = jax.lax.dot_general(
        k_ref[0], q_ref[0],
        dimension_numbers=(((1,), (1,)), ((), ())),
        preferred_element_type=jnp.float32)                          # (Tk, Tq)

    # Online softmax with deferred normalisation (P stays un-normalised).
    m_prev = m_scr[...]                                              # (1, Tq)
    m_new = jnp.maximum(m_prev, jnp.max(s, axis=0, keepdims=True))   # (1, Tq)
    alpha = jnp.exp(m_prev - m_new)                                  # (1, Tq)
    p = jnp.exp(s - m_new)                                           # (Tk, Tq) f32
    l_scr[...] = alpha * l_scr[...] + jnp.sum(p, axis=0, keepdims=True)
    m_scr[...] = m_new

    v = v_ref[0]                                                     # (Cin, Tk)
    p_mx = p.astype(v.dtype)                                         # bf16 feed for MXU
    # Two plain NN matmuls (no concat copy); V^2 on the VPU is negligible next
    # to the MXU work and avoids streaming an extra H^2 array from HBM.
    acc1_scr[...] = alpha * acc1_scr[...] + jnp.dot(
        v, p_mx, preferred_element_type=jnp.float32)                 # (Cin, Tq)
    acc2_scr[...] = alpha * acc2_scr[...] + jnp.dot(
        v * v, p_mx, preferred_element_type=jnp.float32)             # (Cin, Tq)

    @pl.when(ks == pl.num_programs(2) - 1)
    def _finalize():
        # Exact divide: once per q-tile, off the hot loop.  (An approx EUP
        # reciprocal here gets amplified by the E[x^2]-mean^2 cancellation.)
        inv_l = 1.0 / l_scr[...]                                     # (1, Tq)
        mean = acc1_scr[...] * inv_l                                 # (Cin, Tq)
        ex2 = acc2_scr[...] * inv_l
        std = jnp.sqrt(jnp.maximum(ex2 - mean * mean, 0.0))
        # mean_variance_norm(content) with precomputed full-extent stats.
        ct_norm = (ct_ref[0].astype(jnp.float32) - cmean_ref[0]) * cistd_ref[0]
        o_ref[0] = (std * ct_norm + mean).astype(o_ref.dtype)        # lane-dense


def _pick_tile(n, target):
    """Largest multiple of 128 <= target that divides n, else n (full extent)."""
    t = min(target, (n // 128) * 128)
    while t >= 128:
        if n % t == 0:
            return t
        t -= 128
    return n


def adaattn_pallas(content, style, content_key, style_key, params, *,
                   tile_q=512, tile_k=1024, activation_dtype=jnp.bfloat16,
                   vmem_limit_bytes=48 * 1024 * 1024):
    """AdaAttN forward.  Inputs are NCHW, exactly like the torch module."""
    b, cin, h, w = content.shape
    _, _, hsp, wsp = style.shape
    ckp = content_key.shape[1]
    nc, ns = h * w, hsp * wsp

    # TODO(synk): torch's randperm style-subsampling branch (h_g*w_g > max_sample,
    # default max_sample = 256*256) is not implemented; it is never taken here.

    act_dt = activation_dtype if activation_dtype is not None else content.dtype

    # NCHW -> (b, C, H*W): pure reshape (matches torch .view), no HBM transpose.
    ck_f = content_key.reshape(b, ckp, nc)
    sk_f = style_key.reshape(b, ckp, ns)
    st_f = style.reshape(b, cin, ns)
    # Raw content is only used in the finalize; keep it f32 (tiny extra traffic).
    ct_f = content.reshape(b, cin, nc).astype(jnp.float32)

    # 1x1-conv projections F/G/H once per batch in XLA (bf16 operands, f32
    # accumulation), so the kernel never re-projects kv tiles per q-tile.
    # Q/K come out spatial-major so the in-kernel score dot needs no transpose.
    def proj(x, w_, b_, *, spatial_major):
        xw = x.astype(act_dt)
        ww = w_.astype(act_dt)
        bb = b_.astype(jnp.float32)
        if spatial_major:
            y = jnp.einsum("oc,bcn->bno", ww, xw,
                           preferred_element_type=jnp.float32) + bb[None, None, :]
        else:
            y = jnp.einsum("oc,bcn->bon", ww, xw,
                           preferred_element_type=jnp.float32) + bb[None, :, None]
        return y.astype(act_dt)

    q_t = proj(ck_f, params["wf"], params["bf"], spatial_major=True)   # (b, Nc, Ck)
    k_t = proj(sk_f, params["wg"], params["bg"], spatial_major=True)   # (b, Ns, Ck)
    v_c = proj(st_f, params["wh"], params["bh"], spatial_major=False)  # (b, Cin, Ns)

    # mean_variance_norm stats must span the FULL spatial extent (the q axis is
    # tiled inside the kernel), so they come from a tiny f32 pre-pass.
    ct32 = content.reshape(b, cin, nc).astype(jnp.float32)
    cmean = jnp.mean(ct32, axis=2, keepdims=True)                    # (b, Cin, 1)
    denom = max(nc - 1, 1)                                           # torch .var is unbiased
    cvar = jnp.sum((ct32 - cmean) ** 2, axis=2, keepdims=True) / denom + EPS
    cistd = jax.lax.rsqrt(cvar)                                      # (b, Cin, 1)

    tq = _pick_tile(nc, tile_q)
    tk = _pick_tile(ns, tile_k)
    grid = (b, nc // tq, ns // tk)

    qmap = lambda bi, qi, ki: (bi, qi, 0)      # spatial-major query tiles
    kmap = lambda bi, qi, ki: (bi, ki, 0)      # spatial-major key tiles
    vmap_ = lambda bi, qi, ki: (bi, 0, ki)     # channel-major value tiles
    cmap = lambda bi, qi, ki: (bi, 0, qi)      # channel-major content / output tiles
    smap = lambda bi, qi, ki: (bi, 0, 0)       # per-batch stats (grid-invariant per batch)

    out = pl.pallas_call(
        _adaattn_kernel,
        out_shape=jax.ShapeDtypeStruct((b, cin, nc), content.dtype),
        grid_spec=pltpu.PrefetchScalarGridSpec(
            num_scalar_prefetch=0,
            grid=grid,
            in_specs=[
                pl.BlockSpec((1, tq, ckp), qmap),    # Q = F^T tile
                pl.BlockSpec((1, tk, ckp), kmap),    # K = G^T tile
                pl.BlockSpec((1, cin, tk), vmap_),   # V = H tile
                pl.BlockSpec((1, cin, tq), cmap),    # raw content q-tile (f32)
                pl.BlockSpec((1, cin, 1), smap),     # content mean
                pl.BlockSpec((1, cin, 1), smap),     # content 1/std
            ],
            out_specs=pl.BlockSpec((1, cin, tq), cmap),
            scratch_shapes=[
                pltpu.VMEM((1, tq), jnp.float32),        # running row-max
                pltpu.VMEM((1, tq), jnp.float32),        # running row-sum
                pltpu.VMEM((cin, tq), jnp.float32),      # running sum(P*V)
                pltpu.VMEM((cin, tq), jnp.float32),      # running sum(P*V^2)
            ],
        ),
        compiler_params=pltpu.CompilerParams(
            # batch + q-tile axes may be split across TensorCores (v7x megacore);
            # the kv axis carries the online-softmax accumulators -> arbitrary.
            dimension_semantics=("parallel", "parallel", "arbitrary"),
            # Budgeted for v7x's 64 MiB physical VMEM at the default tiles;
            # raise (and grow tiles) on v5e/v6e which have 128 MiB.
            vmem_limit_bytes=vmem_limit_bytes,
        ),
    )(q_t, k_t, v_c, ct_f, cmean, cistd)

    # (b, Cin, H*W) -> NCHW: free reshape, no transpose.
    return out.reshape(b, cin, h, w)


def adaattn_reference(content, style, content_key, style_key, params):
    """Pure-JAX (f32) mirror of the PyTorch forward, for correctness checking."""
    def conv1x1(x, w_, b_):
        return jnp.einsum("oc,bchw->bohw", w_, x) + b_[None, :, None, None]

    F = conv1x1(content_key, params["wf"], params["bf"])
    G = conv1x1(style_key, params["wg"], params["bg"])
    H = conv1x1(style, params["wh"], params["bh"])

    b, _, hg, wg_ = G.shape
    Gf = G.reshape(b, -1, hg * wg_)
    style_flat = jnp.transpose(H.reshape(b, -1, hg * wg_), (0, 2, 1))

    b, _, h, w = F.shape
    Fm = jnp.transpose(F.reshape(b, -1, h * w), (0, 2, 1))
    S = jax.nn.softmax(jnp.einsum("bnc,bcm->bnm", Fm, Gf), axis=-1)
    mean = jnp.einsum("bnm,bmc->bnc", S, style_flat)
    std = jnp.sqrt(jnp.maximum(
        jnp.einsum("bnm,bmc->bnc", S, style_flat ** 2) - mean ** 2, 0.0))
    mean = jnp.transpose(mean.reshape(b, h, w, -1), (0, 3, 1, 2))
    std = jnp.transpose(std.reshape(b, h, w, -1), (0, 3, 1, 2))

    N, C = content.shape[:2]
    cf = content.reshape(N, C, -1)
    cvar = jnp.var(cf, axis=2, ddof=1) + EPS
    cstd = jnp.sqrt(cvar)[:, :, None, None]
    cmean = jnp.mean(cf, axis=2)[:, :, None, None]
    norm = (content - cmean) / cstd
    return std * norm + mean


if __name__ == "__main__":
    key = jax.random.PRNGKey(0)
    # Small but layout-friendly sizes: 128 channels, 16x16 maps -> Nc = Ns = 256,
    # tiled 128 so the online softmax accumulates across 2 kv tiles and 2 query
    # tiles per batch element (exercises init/accumulate/finalize gating).
    b, in_planes, key_planes = 2, 128, 128
    h = w = 16
    hs = ws = 16

    ks = jax.random.split(key, 10)
    content = jax.random.normal(ks[0], (b, in_planes, h, w), jnp.float32)
    style = jax.random.normal(ks[1], (b, in_planes, hs, ws), jnp.float32)
    content_key = jax.random.normal(ks[2], (b, key_planes, h, w), jnp.float32)
    style_key = jax.random.normal(ks[3], (b, key_planes, hs, ws), jnp.float32)

    # Synthetic Conv2d(1x1) parameters ((out, in) and (out,)).  Key/query scale
    # keeps attention logits O(1) so the softmax stays soft (a near-one-hot
    # softmax is a property of trained weights, not of the kernel under test).
    params = {
        "wf": 0.03 * jax.random.normal(ks[4], (key_planes, key_planes), jnp.float32),
        "bf": 0.05 * jax.random.normal(ks[5], (key_planes,), jnp.float32),
        "wg": 0.03 * jax.random.normal(ks[6], (key_planes, key_planes), jnp.float32),
        "bg": 0.05 * jax.random.normal(ks[7], (key_planes,), jnp.float32),
        "wh": 0.1 * jax.random.normal(ks[8], (in_planes, in_planes), jnp.float32),
        "bh": 0.1 * jax.random.normal(ks[9], (in_planes,), jnp.float32),
    }

    ref = adaattn_reference(content, style, content_key, style_key, params)

    # 1) f32 activation path: validates kernel structure / online softmax exactly.
    out_f32 = adaattn_pallas(content, style, content_key, style_key, params,
                             tile_q=128, tile_k=128,
                             activation_dtype=jnp.float32)
    out_f32 = jax.block_until_ready(out_f32)
    assert out_f32.shape == (b, in_planes, h, w)
    err32 = float(jnp.max(jnp.abs(out_f32 - ref)))
    assert jnp.allclose(out_f32, ref, atol=1e-2, rtol=1e-2), err32

    # 2) default bf16 MXU-operand path: tolerance sized for bf16 matmul rounding
    #    (softmax/accumulator/finalize math is still f32).
    out_bf16 = adaattn_pallas(content, style, content_key, style_key, params,
                              tile_q=128, tile_k=128)
    out_bf16 = jax.block_until_ready(out_bf16)
    assert out_bf16.shape == (b, in_planes, h, w)
    errbf = float(jnp.max(jnp.abs(out_bf16 - ref)))
    assert jnp.allclose(out_bf16, ref, atol=3e-2, rtol=3e-2), errbf

    print("KERNEL_OK")
</pallas_src>

<mosaic_0001>
module attributes {stable_mosaic.version = 11 : i64} {
  func.func @_adaattn_kernel(%arg0: i32, %arg1: i32, %arg2: i32, %arg3: memref<1x128x128xf32, #tpu.memory_space<vmem>>, %arg4: memref<1x128x128xf32, #tpu.memory_space<vmem>>, %arg5: memref<1x128x128xf32, #tpu.memory_space<vmem>>, %arg6: memref<1x128x128xf32, #tpu.memory_space<vmem>>, %arg7: memref<1x128x1xf32, #tpu.memory_space<vmem>>, %arg8: memref<1x128x1xf32, #tpu.memory_space<vmem>>, %arg9: memref<1x128x128xf32, #tpu.memory_space<vmem>>, %arg10: memref<1x128xf32, #tpu.memory_space<vmem>>, %arg11: memref<1x128xf32, #tpu.memory_space<vmem>>, %arg12: memref<128x128xf32, #tpu.memory_space<vmem>>, %arg13: memref<128x128xf32, #tpu.memory_space<vmem>>) attributes {dimension_semantics = [#tpu.dimension_semantics<parallel>, #tpu.dimension_semantics<parallel>, #tpu.dimension_semantics<arbitrary>], iteration_bounds = array<i64: 2, 2, 2>, scalar_prefetch = 0 : i64, scratch_operands = 4 : i64, tpu.core_type = #tpu.core_type<tc>, window_params = [{transform_indices = @transform_0, window_bounds = array<i64: 1, 128, 128>}, {transform_indices = @transform_1, window_bounds = array<i64: 1, 128, 128>}, {transform_indices = @transform_2, window_bounds = array<i64: 1, 128, 128>}, {transform_indices = @transform_3, window_bounds = array<i64: 1, 128, 128>}, {transform_indices = @transform_4, window_bounds = array<i64: 1, 128, 1>}, {transform_indices = @transform_5, window_bounds = array<i64: 1, 128, 1>}, {transform_indices = @transform_6, window_bounds = array<i64: 1, 128, 128>}]} {
    %c0_i32 = arith.constant 0 : i32
    %0 = arith.cmpi eq, %arg2, %c0_i32 : i32
    %1 = arith.extui %0 : i1 to i32
    %c0_i32_0 = arith.constant 0 : i32
    %2 = arith.cmpi ne, %1, %c0_i32_0 : i32
    scf.if %2 {
      %cst_30 = arith.constant 0xFF800000 : f32
      %42 = vector.broadcast %cst_30 : f32 to vector<1x128xf32>
      %c0_31 = arith.constant 0 : index
      %c0_32 = arith.constant 0 : index
      %43 = vector.load %arg10[%c0_31, %c0_32] : memref<1x128xf32, #tpu.memory_space<vmem>>, vector<1x128xf32>
      tpu.vector_store %arg10[%c0_31, %c0_32], %42 {strides = array<i32>} : memref<1x128xf32, #tpu.memory_space<vmem>>, vector<1x128xf32>,
      %cst_33 = arith.constant 0.000000e+00 : f32
      %44 = vector.broadcast %cst_33 : f32 to vector<1x128xf32>
      %c0_34 = arith.constant 0 : index
      %c0_35 = arith.constant 0 : index
      %45 = vector.load %arg11[%c0_34, %c0_35] : memref<1x128xf32, #tpu.memory_space<vmem>>, vector<1x128xf32>
      tpu.vector_store %arg11[%c0_34, %c0_35], %44 {strides = array<i32>} : memref<1x128xf32, #tpu.memory_space<vmem>>, vector<1x128xf32>,
      %cst_36 = arith.constant 0.000000e+00 : f32
      %46 = vector.broadcast %cst_36 : f32 to vector<128x128xf32>
      %c0_37 = arith.constant 0 : index
      %c0_38 = arith.constant 0 : index
      %47 = vector.load %arg12[%c0_37, %c0_38] : memref<128x128xf32, #tpu.memory_space<vmem>>, vector<128x128xf32>
      tpu.vector_store %arg12[%c0_37, %c0_38], %46 {strides = array<i32>} : memref<128x128xf32, #tpu.memory_space<vmem>>, vector<128x128xf32>,
      %cst_39 = arith.constant 0.000000e+00 : f32
      %48 = vector.broadcast %cst_39 : f32 to vector<128x128xf32>
      %c0_40 = arith.constant 0 : index
      %c0_41 = arith.constant 0 : index
      %49 = vector.load %arg13[%c0_40, %c0_41] : memref<128x128xf32, #tpu.memory_space<vmem>>, vector<128x128xf32>
      tpu.vector_store %arg13[%c0_40, %c0_41], %48 {strides = array<i32>} : memref<128x128xf32, #tpu.memory_space<vmem>>, vector<128x128xf32>,
    } else {
    }
    %c0 = arith.constant 0 : index
    %c0_1 = arith.constant 0 : index
    %c0_2 = arith.constant 0 : index
    %3 = vector.load %arg4[%c0, %c0_1, %c0_2] : memref<1x128x128xf32, #tpu.memory_space<vmem>>, vector<1x128x128xf32>
    %4 = vector.shape_cast %3 : vector<1x128x128xf32> to vector<128x128xf32>
    %c0_3 = arith.constant 0 : index
    %c0_4 = arith.constant 0 : index
    %c0_5 = arith.constant 0 : index
    %5 = vector.load %arg3[%c0_3, %c0_4, %c0_5] : memref<1x128x128xf32, #tpu.memory_space<vmem>>, vector<1x128x128xf32>
    %6 = vector.shape_cast %5 : vector<1x128x128xf32> to vector<128x128xf32>
    %cst = arith.constant dense<0.000000e+00> : vector<128x128xf32>
    %7 = tpu.matmul %4, %6, %cst {dimension_numbers = #tpu.dot_dimension_numbers<[1], [1], [0], [0], [0, 0, 1, 0], [], []>} : vector<128x128xf32>, vector<128x128xf32>, vector<128x128xf32> -> vector<128x128xf32>
    %c0_6 = arith.constant 0 : index
    %c0_7 = arith.constant 0 : index
    %8 = vector.load %arg10[%c0_6, %c0_7] : memref<1x128xf32, #tpu.memory_space<vmem>>, vector<1x128xf32>
    %cst_8 = arith.constant dense<0xFF800000> : vector<128xf32>
    %9 = vector.multi_reduction <maximumf>, %7, %cst_8 [0] : vector<128x128xf32> to vector<128xf32>
    %10 = vector.shape_cast %9 : vector<128xf32> to vector<1x128xf32>
    %11 = arith.maximumf %8, %10 : vector<1x128xf32>
    %12 = arith.subf %8, %11 : vector<1x128xf32>
    %13 = math.exp %12 : vector<1x128xf32>
    %14 = vector.broadcast %11 : vector<1x128xf32> to vector<128x128xf32>
    %15 = arith.subf %7, %14 : vector<128x128xf32>
    %16 = math.exp %15 : vector<128x128xf32>
    %c0_9 = arith.constant 0 : index
    %c0_10 = arith.constant 0 : index
    %17 = vector.load %arg11[%c0_9, %c0_10] : memref<1x128xf32, #tpu.memory_space<vmem>>, vector<1x128xf32>
    %18 = arith.mulf %13, %17 : vector<1x128xf32>
    %cst_11 = arith.constant dense<0.000000e+00> : vector<128xf32>
    %19 = vector.multi_reduction <add>, %16, %cst_11 [0] : vector<128x128xf32> to vector<128xf32>
    %20 = vector.shape_cast %19 : vector<128xf32> to vector<1x128xf32>
    %21 = arith.addf %18, %20 : vector<1x128xf32>
    %c0_12 = arith.constant 0 : index
    %c0_13 = arith.constant 0 : index
    %22 = vector.load %arg11[%c0_12, %c0_13] : memref<1x128xf32, #tpu.memory_space<vmem>>, vector<1x128xf32>
    tpu.vector_store %arg11[%c0_12, %c0_13], %21 {strides = array<i32>} : memref<1x128xf32, #tpu.memory_space<vmem>>, vector<1x128xf32>,
    %c0_14 = arith.constant 0 : index
    %c0_15 = arith.constant 0 : index
    %23 = vector.load %arg10[%c0_14, %c0_15] : memref<1x128xf32, #tpu.memory_space<vmem>>, vector<1x128xf32>
    tpu.vector_store %arg10[%c0_14, %c0_15], %11 {strides = array<i32>} : memref<1x128xf32, #tpu.memory_space<vmem>>, vector<1x128xf32>,
    %c0_16 = arith.constant 0 : index
    %c0_17 = arith.constant 0 : index
    %c0_18 = arith.constant 0 : index
    %24 = vector.load %arg5[%c0_16, %c0_17, %c0_18] : memref<1x128x128xf32, #tpu.memory_space<vmem>>, vector<1x128x128xf32>
    %25 = vector.shape_cast %24 : vector<1x128x128xf32> to vector<128x128xf32>
    %c0_19 = arith.constant 0 : index
    %c0_20 = arith.constant 0 : index
    %26 = vector.load %arg12[%c0_19, %c0_20] : memref<128x128xf32, #tpu.memory_space<vmem>>, vector<128x128xf32>
    %27 = vector.broadcast %13 : vector<1x128xf32> to vector<128x128xf32>
    %28 = arith.mulf %27, %26 : vector<128x128xf32>
    %cst_21 = arith.constant dense<0.000000e+00> : vector<128x128xf32>
    %29 = tpu.matmul %25, %16, %cst_21 {dimension_numbers = #tpu.dot_dimension_numbers<[1], [0], [0], [1], [0, 0, 1, 1], [], []>} : vector<128x128xf32>, vector<128x128xf32>, vector<128x128xf32> -> vector<128x128xf32>
    %30 = arith.addf %28, %29 : vector<128x128xf32>
    %c0_22 = arith.constant 0 : index
    %c0_23 = arith.constant 0 : index
    %31 = vector.load %arg12[%c0_22, %c0_23] : memref<128x128xf32, #tpu.memory_space<vmem>>, vector<128x128xf32>
    tpu.vector_store %arg12[%c0_22, %c0_23], %30 {strides = array<i32>} : memref<128x128xf32, #tpu.memory_space<vmem>>, vector<128x128xf32>,
    %c0_24 = arith.constant 0 : index
    %c0_25 = arith.constant 0 : index
    %32 = vector.load %arg13[%c0_24, %c0_25] : memref<128x128xf32, #tpu.memory_space<vmem>>, vector<128x128xf32>
    %33 = vector.broadcast %13 : vector<1x128xf32> to vector<128x128xf32>
    %34 = arith.mulf %33, %32 : vector<128x128xf32>
    %35 = arith.mulf %25, %25 : vector<128x128xf32>
    %cst_26 = arith.constant dense<0.000000e+00> : vector<128x128xf32>
    %36 = tpu.matmul %35, %16, %cst_26 {dimension_numbers = #tpu.dot_dimension_numbers<[1], [0], [0], [1], [0, 0, 1, 1], [], []>} : vector<128x128xf32>, vector<128x128xf32>, vector<128x128xf32> -> vector<128x128xf32>
    %37 = arith.addf %34, %36 : vector<128x128xf32>
    %c0_27 = arith.constant 0 : index
    %c0_28 = arith.constant 0 : index
    %38 = vector.load %arg13[%c0_27, %c0_28] : memref<128x128xf32, #tpu.memory_space<vmem>>, vector<128x128xf32>
    tpu.vector_store %arg13[%c0_27, %c0_28], %37 {strides = array<i32>} : memref<128x128xf32, #tpu.memory_space<vmem>>, vector<128x128xf32>,
    %c1_i32 = arith.constant 1 : i32
    %39 = arith.cmpi eq, %arg2, %c1_i32 : i32
    %40 = arith.extui %39 : i1 to i32
    %c0_i32_29 = arith.constant 0 : i32
    %41 = arith.cmpi ne, %40, %c0_i32_29 : i32
    scf.if %41 {
      %c0_30 = arith.constant 0 : index
      %c0_31 = arith.constant 0 : index
      %42 = vector.load %arg11[%c0_30, %c0_31] : memref<1x128xf32, #tpu.memory_space<vmem>>, vector<1x128xf32>
      %cst_32 = arith.constant 1.000000e+00 : f32
      %43 = vector.broadcast %cst_32 : f32 to vector<1x128xf32>
      %44 = arith.divf %43, %42 : vector<1x128xf32>
      %c0_33 = arith.constant 0 : index
      %c0_34 = arith.constant 0 : index
      %45 = vector.load %arg12[%c0_33, %c0_34] : memref<128x128xf32, #tpu.memory_space<vmem>>, vector<128x128xf32>
      %46 = vector.broadcast %44 : vector<1x128xf32> to vector<128x128xf32>
      %47 = arith.mulf %45, %46 : vector<128x128xf32>
      %c0_35 = arith.constant 0 : index
      %c0_36 = arith.constant 0 : index
      %48 = vector.load %arg13[%c0_35, %c0_36] : memref<128x128xf32, #tpu.memory_space<vmem>>, vector<128x128xf32>
      %49 = vector.broadcast %44 : vector<1x128xf32> to vector<128x128xf32>
      %50 = arith.mulf %48, %49 : vector<128x128xf32>
      %51 = arith.mulf %47, %47 : vector<128x128xf32>
      %52 = arith.subf %50, %51 : vector<128x128xf32>
      %cst_37 = arith.constant 0.000000e+00 : f32
      %53 = vector.broadcast %cst_37 : f32 to vector<128x128xf32>
      %54 = arith.maximumf %52, %53 : vector<128x128xf32>
      %55 = math.sqrt %54 : vector<128x128xf32>
      %c0_38 = arith.constant 0 : index
      %c0_39 = arith.constant 0 : index
      %c0_40 = arith.constant 0 : index
      %56 = vector.load %arg6[%c0_38, %c0_39, %c0_40] : memref<1x128x128xf32, #tpu.memory_space<vmem>>, vector<1x128x128xf32>
      %57 = vector.shape_cast %56 : vector<1x128x128xf32> to vector<128x128xf32>
      %c0_41 = arith.constant 0 : index
      %c0_42 = arith.constant 0 : index
      %c0_43 = arith.constant 0 : index
      %58 = vector.load %arg7[%c0_41, %c0_42, %c0_43] : memref<1x128x1xf32, #tpu.memory_space<vmem>>, vector<1x128x1xf32>
      %59 = vector.shape_cast %58 : vector<1x128x1xf32> to vector<128x1xf32>
      %60 = vector.broadcast %59 : vector<128x1xf32> to vector<128x128xf32>
      %61 = arith.subf %57, %60 : vector<128x128xf32>
      %c0_44 = arith.constant 0 : index
      %c0_45 = arith.constant 0 : index
      %c0_46 = arith.constant 0 : index
      %62 = vector.load %arg8[%c0_44, %c0_45, %c0_46] : memref<1x128x1xf32, #tpu.memory_space<vmem>>, vector<1x128x1xf32>
      %63 = vector.shape_cast %62 : vector<1x128x1xf32> to vector<128x1xf32>
      %64 = vector.broadcast %63 : vector<128x1xf32> to vector<128x128xf32>
      %65 = arith.mulf %61, %64 : vector<128x128xf32>
      %66 = arith.mulf %55, %65 : vector<128x128xf32>
      %67 = arith.addf %66, %47 : vector<128x128xf32>
      %c0_47 = arith.constant 0 : index
      %c0_48 = arith.constant 0 : index
      %c0_49 = arith.constant 0 : index
      %68 = vector.load %arg9[%c0_47, %c0_48, %c0_49] : memref<1x128x128xf32, #tpu.memory_space<vmem>>, vector<1x128x128xf32>
      %69 = vector.shape_cast %68 : vector<1x128x128xf32> to vector<128x128xf32>
      %70 = vector.shape_cast %67 : vector<128x128xf32> to vector<1x128x128xf32>
      tpu.vector_store %arg9[%c0_47, %c0_48, %c0_49], %70 {strides = array<i32>} : memref<1x128x128xf32, #tpu.memory_space<vmem>>, vector<1x128x128xf32>,
    } else {
    }
    return
  }
  func.func @transform_0(%arg0: i32, %arg1: i32, %arg2: i32) -> (i32, i32, i32) {
    %c0_i32 = arith.constant 0 : i32
    %c0_i32_0 = arith.constant 0 : i32
    return %arg0, %arg1, %c0_i32 : i32, i32, i32
  }
  func.func @transform_1(%arg0: i32, %arg1: i32, %arg2: i32) -> (i32, i32, i32) {
    %c0_i32 = arith.constant 0 : i32
    %c0_i32_0 = arith.constant 0 : i32
    return %arg0, %arg2, %c0_i32 : i32, i32, i32
  }
  func.func @transform_2(%arg0: i32, %arg1: i32, %arg2: i32) -> (i32, i32, i32) {
    %c0_i32 = arith.constant 0 : i32
    %c0_i32_0 = arith.constant 0 : i32
    return %arg0, %c0_i32, %arg2 : i32, i32, i32
  }
  func.func @transform_3(%arg0: i32, %arg1: i32, %arg2: i32) -> (i32, i32, i32) {
    %c0_i32 = arith.constant 0 : i32
    %c0_i32_0 = arith.constant 0 : i32
    return %arg0, %c0_i32, %arg1 : i32, i32, i32
  }
  func.func @transform_4(%arg0: i32, %arg1: i32, %arg2: i32) -> (i32, i32, i32) {
    %c0_i32 = arith.constant 0 : i32
    %c0_i32_0 = arith.constant 0 : i32
    %c0_i32_1 = arith.constant 0 : i32
    return %arg0, %c0_i32, %c0_i32_0 : i32, i32, i32
  }
  func.func @transform_5(%arg0: i32, %arg1: i32, %arg2: i32) -> (i32, i32, i32) {
    %c0_i32 = arith.constant 0 : i32
    %c0_i32_0 = arith.constant 0 : i32
    %c0_i32_1 = arith.constant 0 : i32
    return %arg0, %c0_i32, %c0_i32_0 : i32, i32, i32
  }
  func.func @transform_6(%arg0: i32, %arg1: i32, %arg2: i32) -> (i32, i32, i32) {
    %c0_i32 = arith.constant 0 : i32
    %c0_i32_0 = arith.constant 0 : i32
    return %arg0, %c0_i32, %arg1 : i32, i32, i32
  }
}

</mosaic_0001>

<llo_original>
// kernel: tpu_custom_call.1
$region0: #{tpu_custom_call.1}
  #allocation0 [shape = 'u32[]', space=smem, size = 0x4, offset = 0x4, fixed_abs, tag = 'smem constant byte address 0x4 - core index']
  #allocation1 [shape = 'u32[144,128]{1,0:T(1,128)}', space=vmem, size = 0x12000, scoped, tag = 'internal scratch']
  #allocation2 [shape = 'f32[1,128]{1,0:T(1,128)}', space=vmem, size = 0x200, scoped, tag = 'scratch operand']
  #allocation3 [shape = 'f32[1,128]{1,0:T(1,128)}', space=vmem, size = 0x200, scoped, tag = 'scratch operand']
  #allocation4 [shape = 'f32[128,128]{1,0:T(8,128)}', space=vmem, size = 0x10000, scoped, tag = 'scratch operand']
  #allocation5 [shape = 'f32[128,128]{1,0:T(8,128)}', space=vmem, size = 0x10000, scoped, tag = 'scratch operand']
  %s0 = inlined_call_operand.vmem [shape: f32[2,256,128], index: 0, kind: input, shape index: {}]
  %s1 = inlined_call_operand.hbm [shape: f32[2,256,128], index: 1, kind: input, shape index: {}]
  %s2 = inlined_call_operand.hbm [shape: f32[2,128,256], index: 2, kind: input, shape index: {}]
  %s3 = inlined_call_operand.hbm [shape: f32[2,128,256], index: 3, kind: input, shape index: {}]
  %s4 = inlined_call_operand.vmem [shape: f32[2,128,1], index: 4, kind: input, shape index: {}]
  %s5 = inlined_call_operand.vmem [shape: f32[2,128,1], index: 5, kind: input, shape index: {}]
  %s6 = inlined_call_operand.hbm [shape: f32[2,128,256], index: 6, kind: output, shape index: {}]
  %s7 = sld [smem:[#allocation0]]
  $region77: #{tpu_custom_call.1} parent=0
    _
  %s9 = ssub.s32 1, %s7
  %s10 = scalar_select 0, %s9, %s7
  $region1: #{tpu_custom_call.1} parent=0
    #allocation6 [shape = 'u8[131072]{0}', space=vmem, size = 0x20000, scoped, tag = 'input window, operand 1']
    #allocation7 [shape = 's32[2]{0}', space=sflag, size = 0x8, scoped, tag = 'scoped memory for tpu_custom_call.1']
    #allocation8 [shape = 's32[2]{0}', space=sflag, size = 0x8, scoped, tag = 'scoped memory for tpu_custom_call.1']
    #allocation9 [shape = 'u8[131072]{0}', space=vmem, size = 0x20000, scoped, tag = 'input window, operand 2']
    #allocation10 [shape = 's32[2]{0}', space=sflag, size = 0x8, scoped, tag = 'scoped memory for tpu_custom_call.1']
    #allocation11 [shape = 'u8[131072]{0}', space=vmem, size = 0x20000, scoped, tag = 'input window, operand 3']
    #allocation12 [shape = 'u8[131072]{0}', space=vmem, size = 0x20000, scoped, tag = 'output window, operand 0']
    %11 = vsyncpa [#allocation7], 0
    %s12 = scalar_lea.sflag [#allocation7], 1
    %13 = vsyncpa %s12, 0
    %14 = vsyncpa [#allocation10], 0
    %s15 = scalar_lea.sflag [#allocation10], 1
    %16 = vsyncpa %s15, 0
    %17 = vsyncpa [#allocation8], 0
    %s18 = scalar_lea.sflag [#allocation8], 1
    %19 = vsyncpa %s18, 0
    loop: start=0, step=1, limit=10
    $region2: #{tpu_custom_call.1} parent=1 // loop_pre_header
      _
    $region3: #{tpu_custom_call.1} parent=1 // loop_header
      %s21 = sphi 0, %s25
      %p22 = scmp.ge.s32.totalorder %s21, 10
      %s28 = sphi 0, %s47
      %s29 = sphi 0, %s43
      %s30 = sphi 0, %s39
      %s31 = sphi 0, %s28
      %s32 = sphi 0, %s29
      %s33 = sphi 0, %s30
      %s34 = sphi 0, %s31
      %s35 = sphi 0, %s32
      %s36 = sphi 0, %s33
      %s52 = sphi 0, %s54
      %s55 = sphi 0, %s52
      %s56 = sphi 0, %s55
      %s72 = sphi 0, %s56
      %s80 = sphi 0, %s82
      %s83 = sphi 0, %s80
      %s84 = sphi 0, %s83
      %s100 = sphi 0, %s84
      %s108 = sphi 0, %s110
      %s111 = sphi 0, %s108
      %s112 = sphi 0, %s111
      %s128 = sphi 0, %s112
      %s136 = sphi 0, %s138
      %s139 = sphi 0, %s136
      %s140 = sphi 0, %s139
      %s156 = sphi 0, %s140
      %s162 = sphi 0, %s164
      %s165 = sphi 0, %s162
      %s166 = sphi 0, %s165
      %s182 = sphi 0, %s166
      %s188 = sphi 0, %s190
      %s191 = sphi 0, %s188
      %s192 = sphi 0, %s191
      %s208 = sphi 0, %s192
      %s216 = sphi 0, %s218
      %s219 = sphi 0, %s216
      %s220 = sphi 0, %s219
      %s236 = sphi 0, %s220
    $region4: #{tpu_custom_call.1} parent=1 // loop_header_branch
      %24 = sbr.rel (%p22) target = $region8
    $region5: #{tpu_custom_call.1} parent=1 // loop_body
      %s26 = ssub.s32 %s21, 1
      %s27 = ssub.s32 %s21, 2
      %s37 = sadd.s32 1, %s30
      %p38 = scmp.ge.s32.totalorder %s37, 2
      %s39 = scalar_select %p38, 0, %s37
      %s40 = sadd.s32 1, %s29
      %s41 = scalar_select %p38, %s40, %s29
      %p42 = scmp.ge.s32.totalorder %s41, 2
      %s43 = scalar_select %p42, 0, %s41
      %s44 = sadd.s32 1, %s28
      %s45 = scalar_select %p42, %s44, %s28
      %p46 = scmp.ge.s32.totalorder %s45, 2
      %s47 = scalar_select %p46, 0, %s45
      %s48 = ssub.s32 %s28, %s47
      %s49 = ssub.s32 %s29, %s43
      %s50 = sor.u32 %s48, %s49
      %p51 = scmp.eq.s32.totalorder %s50, 0
      %s53 = sadd.s32 %s52, 1
      %s54 = scalar_select %p51, %s52, %s53
      %p57 = pneg %p51
      %p58 = scmp.eq.s32.totalorder %s21, 7
      %p59 = por %p57, %p58
      %p60 = scmp.ne.s32.totalorder %s52, %s55
      %p61 = scmp.eq.s32.totalorder %s21, 0
      %p62 = por %p60, %p61
      %p63 = scmp.ne.s32.totalorder %s52, %s55
      %p64 = scmp.eq.s32.totalorder %s26, 7
      %p65 = por %p63, %p64
      %p66 = scmp.ne.s32.totalorder %s55, %s56
      %p67 = scmp.eq.s32.totalorder %s26, 0
      %p68 = por %p66, %p67
      %p69 = scmp.ne.s32.totalorder %s55, %s56
      %p70 = scmp.eq.s32.totalorder %s27, 7
      %p71 = por %p69, %p70
      %p73 = scmp.ne.s32.totalorder %s56, %s72
      %p74 = scmp.eq.s32.totalorder %s27, 0
      %p75 = por %p73, %p74
      %s76 = ssub.s32 %s28, %s47
      %s77 = ssub.s32 %s30, %s39
      %s78 = sor.u32 %s76, %s77
      %p79 = scmp.eq.s32.totalorder %s78, 0
      %s81 = sadd.s32 %s80, 1
      %s82 = scalar_select %p79, %s80, %s81
      %p85 = pneg %p79
      %p86 = scmp.eq.s32.totalorder %s21, 7
      %p87 = por %p85, %p86
      %p88 = scmp.ne.s32.totalorder %s80, %s83
      %p89 = scmp.eq.s32.totalorder %s21, 0
      %p90 = por %p88, %p89
      %p91 = scmp.ne.s32.totalorder %s80, %s83
      %p92 = scmp.eq.s32.totalorder %s26, 7
      %p93 = por %p91, %p92
      %p94 = scmp.ne.s32.totalorder %s83, %s84
      %p95 = scmp.eq.s32.totalorder %s26, 0
      %p96 = por %p94, %p95
      %p97 = scmp.ne.s32.totalorder %s83, %s84
      %p98 = scmp.eq.s32.totalorder %s27, 7
      %p99 = por %p97, %p98
      %p101 = scmp.ne.s32.totalorder %s84, %s100
      %p102 = scmp.eq.s32.totalorder %s27, 0
      %p103 = por %p101, %p102
      %s104 = ssub.s32 %s28, %s47
      %s105 = ssub.s32 %s30, %s39
      %s106 = sor.u32 %s104, %s105
      %p107 = scmp.eq.s32.totalorder %s106, 0
      %s109 = sadd.s32 %s108, 1
      %s110 = scalar_select %p107, %s108, %s109
      %p113 = pneg %p107
      %p114 = scmp.eq.s32.totalorder %s21, 7
      %p115 = por %p113, %p114
      %p116 = scmp.ne.s32.totalorder %s108, %s111
      %p117 = scmp.eq.s32.totalorder %s21, 0
      %p118 = por %p116, %p117
      %p119 = scmp.ne.s32.totalorder %s108, %s111
      %p120 = scmp.eq.s32.totalorder %s26, 7
      %p121 = por %p119, %p120
      %p122 = scmp.ne.s32.totalorder %s111, %s112
      %p123 = scmp.eq.s32.totalorder %s26, 0
      %p124 = por %p122, %p123
      %p125 = scmp.ne.s32.totalorder %s111, %s112
      %p126 = scmp.eq.s32.totalorder %s27, 7
      %p127 = por %p125, %p126
      %p129 = scmp.ne.s32.totalorder %s112, %s128
      %p130 = scmp.eq.s32.totalorder %s27, 0
      %p131 = por %p129, %p130
      %s132 = ssub.s32 %s28, %s47
      %s133 = ssub.s32 %s29, %s43
      %s134 = sor.u32 %s132, %s133
      %p135 = scmp.eq.s32.totalorder %s134, 0
      %s137 = sadd.s32 %s136, 1
      %s138 = scalar_select %p135, %s136, %s137
      %p141 = pneg %p135
      %p142 = scmp.eq.s32.totalorder %s21, 7
      %p143 = por %p141, %p142
      %p144 = scmp.ne.s32.totalorder %s136, %s139
      %p145 = scmp.eq.s32.totalorder %s21, 0
      %p146 = por %p144, %p145
      %p147 = scmp.ne.s32.totalorder %s136, %s139
      %p148 = scmp.eq.s32.totalorder %s26, 7
      %p149 = por %p147, %p148
      %p150 = scmp.ne.s32.totalorder %s139, %s140
      %p151 = scmp.eq.s32.totalorder %s26, 0
      %p152 = por %p150, %p151
      %p153 = scmp.ne.s32.totalorder %s139, %s140
      %p154 = scmp.eq.s32.totalorder %s27, 7
      %p155 = por %p153, %p154
      %p157 = scmp.ne.s32.totalorder %s140, %s156
      %p158 = scmp.eq.s32.totalorder %s27, 0
      %p159 = por %p157, %p158
      %s160 = ssub.s32 %s28, %s47
      %p161 = scmp.eq.s32.totalorder %s160, 0
      %s163 = sadd.s32 %s162, 1
      %s164 = scalar_select %p161, %s162, %s163
      %p167 = pneg %p161
      %p168 = scmp.eq.s32.totalorder %s21, 7
      %p169 = por %p167, %p168
      %p170 = scmp.ne.s32.totalorder %s162, %s165
      %p171 = scmp.eq.s32.totalorder %s21, 0
      %p172 = por %p170, %p171
      %p173 = scmp.ne.s32.totalorder %s162, %s165
      %p174 = scmp.eq.s32.totalorder %s26, 7
      %p175 = por %p173, %p174
      %p176 = scmp.ne.s32.totalorder %s165, %s166
      %p177 = scmp.eq.s32.totalorder %s26, 0
      %p178 = por %p176, %p177
      %p179 = scmp.ne.s32.totalorder %s165, %s166
      %p180 = scmp.eq.s32.totalorder %s27, 7
      %p181 = por %p179, %p180
      %p183 = scmp.ne.s32.totalorder %s166, %s182
      %p184 = scmp.eq.s32.totalorder %s27, 0
      %p185 = por %p183, %p184
      %s186 = ssub.s32 %s28, %s47
      %p187 = scmp.eq.s32.totalorder %s186, 0
      %s189 = sadd.s32 %s188, 1
      %s190 = scalar_select %p187, %s188, %s189
      %p193 = pneg %p187
      %p194 = scmp.eq.s32.totalorder %s21, 7
      %p195 = por %p193, %p194
      %p196 = scmp.ne.s32.totalorder %s188, %s191
      %p197 = scmp.eq.s32.totalorder %s21, 0
      %p198 = por %p196, %p197
      %p199 = scmp.ne.s32.totalorder %s188, %s191
      %p200 = scmp.eq.s32.totalorder %s26, 7
      %p201 = por %p199, %p200
      %p202 = scmp.ne.s32.totalorder %s191, %s192
      %p203 = scmp.eq.s32.totalorder %s26, 0
      %p204 = por %p202, %p203
      %p205 = scmp.ne.s32.totalorder %s191, %s192
      %p206 = scmp.eq.s32.totalorder %s27, 7
      %p207 = por %p205, %p206
      %p209 = scmp.ne.s32.totalorder %s192, %s208
      %p210 = scmp.eq.s32.totalorder %s27, 0
      %p211 = por %p209, %p210
      %s212 = ssub.s32 %s28, %s47
      %s213 = ssub.s32 %s29, %s43
      %s214 = sor.u32 %s212, %s213
      %p215 = scmp.eq.s32.totalorder %s214, 0
      %s217 = sadd.s32 %s216, 1
      %s218 = scalar_select %p215, %s216, %s217
      %p221 = pneg %p215
      %p222 = scmp.eq.s32.totalorder %s21, 7
      %p223 = por %p221, %p222
      %p224 = scmp.ne.s32.totalorder %s216, %s219
      %p225 = scmp.eq.s32.totalorder %s21, 0
      %p226 = por %p224, %p225
      %p227 = scmp.ne.s32.totalorder %s216, %s219
      %p228 = scmp.eq.s32.totalorder %s26, 7
      %p229 = por %p227, %p228
      %p230 = scmp.ne.s32.totalorder %s219, %s220
      %p231 = scmp.eq.s32.totalorder %s26, 0
      %p232 = por %p230, %p231
      %p233 = scmp.ne.s32.totalorder %s219, %s220
      %p234 = scmp.eq.s32.totalorder %s27, 7
      %p235 = por %p233, %p234
      %p237 = scmp.ne.s32.totalorder %s220, %s236
      %p238 = scmp.eq.s32.totalorder %s27, 0
      %p239 = por %p237, %p238
      %p240 = scmp.le.s32.totalorder 1, %s21
      %p241 = scmp.lt.s32.totalorder %s21, 9
      %p242 = pnand %p240, %p241
      %p243 = pneg %p242
      // Predicated region
      $region9: #{tpu_custom_call.1} parent=5 // pred_check
        _
      $region10: #{tpu_custom_call.1} parent=5 // pred_check_branch
        %245 = sbr.rel (%p242) target = $region12
      $region11: #{tpu_custom_call.1} parent=5 // pred_region
        %s246 = ssub.s32 %s21, 1
      $region12: #{tpu_custom_call.1} parent=5 // pred_fallthru
        _
      %p247 = scmp.lt.s32.totalorder %s21, 8
      // Predicated region
      $region13: #{tpu_custom_call.1} parent=5 // pred_check
        %p248 = pneg %p247
      $region14: #{tpu_custom_call.1} parent=5 // pred_check_branch
        %250 = sbr.rel (%p248) target = $region16
      $region15: #{tpu_custom_call.1} parent=5 // pred_region
        // Predicated region
        $region17: #{tpu_custom_call.1} parent=15 // pred_check
          %p251 = pneg %p62
        $region18: #{tpu_custom_call.1} parent=15 // pred_check_branch
          %253 = sbr.rel (%p251) target = $region20
        $region19: #{tpu_custom_call.1} parent=15 // pred_region
          %s254 = smul.u32 16, %s29
          %p255 = scmp.lt.s32.totalorder %s28, 1
          %s256 = scalar_select %p255, %s28, 1
          %p257 = scmp.lt.s32.totalorder %s254, 31
          %s258 = scalar_select %p257, %s254, 31
          %s259 = smul.addr %s256, 32
          %s260 = sadd.s32 %s258, %s259
          %s261 = smul.addr %s260, 8
          %s262 = scalar_lea.vmem %s0, %s261
          %s263 = smul.u32 16, %s29
        $region20: #{tpu_custom_call.1} parent=15 // pred_fallthru
          _
        // Predicated region
        $region21: #{tpu_custom_call.1} parent=15 // pred_check
          %p264 = pneg %p90
        $region22: #{tpu_custom_call.1} parent=15 // pred_check_branch
          %266 = sbr.rel (%p264) target = $region24
        $region23: #{tpu_custom_call.1} parent=15 // pred_region
          %s267 = sand.u32 %s80, 1
          %s268 = scalar_lea.sflag [#allocation7], %s267
          %s269 = sand.u32 %s80, 1
          %s270 = smul.addr %s269, 128
          %s271 = scalar_lea.vmem [#allocation6], %s270
          %s272 = smul.u32 16, %s30
          %s274 = ssub.s32 2048, 2048
          %275 = vsyncadd %s268, %s274
          %s276 = smul.addr %s28, 32
          %s277 = sadd.s32 %s272, %s276
          %s278 = smul.addr %s277, 128
          %s279 = scalar_lea.hbm %s1, %s278
          %s280 = sshll.u32 %s271, 4
          %s281 = int_to_ptr.vmem [resolvable:$true] %s280
          %286 = dma.hbm_to_vmem [thread:$0]  %s279, 2048, %s281, %s268, 128, 128, 8
        $region24: #{tpu_custom_call.1} parent=15 // pred_fallthru
          _
        // Predicated region
        $region25: #{tpu_custom_call.1} parent=15 // pred_check
          %p287 = pneg %p118
        $region26: #{tpu_custom_call.1} parent=15 // pred_check_branch
          %289 = sbr.rel (%p287) target = $region28
        $region27: #{tpu_custom_call.1} parent=15 // pred_region
          %s290 = sand.u32 %s21, 1
          %s291 = scalar_lea.sflag [#allocation10], %s290
          %s292 = sand.u32 %s108, 1
          %s293 = smul.addr %s292, 128
          %s294 = scalar_lea.vmem [#allocation9], %s293
          %s296 = ssub.s32 2048, 2048
          %297 = vsyncadd %s291, %s296
          %s298 = smul.addr %s28, 32
          %s299 = sadd.s32 %s30, %s298
          %s300 = smul.addr %s299, 128
          %s301 = scalar_lea.hbm %s2, %s300
          %s302 = sshll.u32 %s294, 4
          %s303 = int_to_ptr.vmem [resolvable:$true] %s302
          %308 = dma.hbm_to_vmem [thread:$0]  %s301, 2048, %s303, %s291, 256, 128, 8
        $region28: #{tpu_custom_call.1} parent=15 // pred_fallthru
          _
        // Predicated region
        $region29: #{tpu_custom_call.1} parent=15 // pred_check
          %p309 = pneg %p146
        $region30: #{tpu_custom_call.1} parent=15 // pred_check_branch
          %311 = sbr.rel (%p309) target = $region32
        $region31: #{tpu_custom_call.1} parent=15 // pred_region
          %s312 = sand.u32 %s21, 1
          %s313 = scalar_lea.sflag [#allocation10], %s312
          %s314 = sand.u32 %s136, 1
          %s315 = smul.addr %s314, 128
          %s316 = scalar_lea.vmem [#allocation11], %s315
          %s318 = ssub.s32 2048, 2048
          %319 = vsyncadd %s313, %s318
          %s320 = smul.addr %s28, 32
          %s321 = sadd.s32 %s29, %s320
          %s322 = smul.addr %s321, 128
          %s323 = scalar_lea.hbm %s3, %s322
          %s324 = sshll.u32 %s316, 4
          %s325 = int_to_ptr.vmem [resolvable:$true] %s324
          %330 = dma.hbm_to_vmem [thread:$0]  %s323, 2048, %s325, %s313, 256, 128, 8
        $region32: #{tpu_custom_call.1} parent=15 // pred_fallthru
          _
        // Predicated region
        $region33: #{tpu_custom_call.1} parent=15 // pred_check
          %p331 = pneg %p172
        $region34: #{tpu_custom_call.1} parent=15 // pred_check_branch
          %333 = sbr.rel (%p331) target = $region36
        $region35: #{tpu_custom_call.1} parent=15 // pred_region
          %p334 = scmp.lt.s32.totalorder %s28, 1
          %s335 = scalar_select %p334, %s28, 1
          %s336 = smul.addr %s335, 16
          %s337 = smul.addr %s336, 8
          %s338 = scalar_lea.vmem %s4, %s337
        $region36: #{tpu_custom_call.1} parent=15 // pred_fallthru
          _
        // Predicated region
        $region37: #{tpu_custom_call.1} parent=15 // pred_check
          %p339 = pneg %p198
        $region38: #{tpu_custom_call.1} parent=15 // pred_check_branch
          %341 = sbr.rel (%p339) target = $region40
        $region39: #{tpu_custom_call.1} parent=15 // pred_region
          %p342 = scmp.lt.s32.totalorder %s28, 1
          %s343 = scalar_select %p342, %s28, 1
          %s344 = smul.addr %s343, 16
          %s345 = smul.addr %s344, 8
          %s346 = scalar_lea.vmem %s5, %s345
        $region40: #{tpu_custom_call.1} parent=15 // pred_fallthru
          _
      $region16: #{tpu_custom_call.1} parent=5 // pred_fallthru
        _
      %p347 = scmp.le.s32.totalorder 1, %s21
      %p348 = scmp.lt.s32.totalorder %s21, 9
      %p349 = pnand %p347, %p348
      %p350 = pneg %p349
      // Predicated region
      $region41: #{tpu_custom_call.1} parent=5 // pred_check
        _
      $region42: #{tpu_custom_call.1} parent=5 // pred_check_branch
        %352 = sbr.rel (%p349) target = $region44
      $region43: #{tpu_custom_call.1} parent=5 // pred_region
        %s353 = ssub.s32 %s21, 1
        %s354 = sand.u32 %s83, 1
        %s355 = scalar_lea.sflag [#allocation7], %s354
        %s356 = sand.u32 %s83, 1
        %s357 = smul.addr %s356, 128
        %s358 = scalar_lea.vmem [#allocation6], %s357
        // Predicated region
        $region45: #{tpu_custom_call.1} parent=43 // pred_check
          %p359 = pneg %p96
        $region46: #{tpu_custom_call.1} parent=43 // pred_check_branch
          %361 = sbr.rel (%p359) target = $region48
        $region47: #{tpu_custom_call.1} parent=43 // pred_region
          %362 = dma.done %s355, 2048
        $region48: #{tpu_custom_call.1} parent=43 // pred_fallthru
          _
        %s363 = sand.u32 %s26, 1
        %s364 = scalar_lea.sflag [#allocation10], %s363
        %s365 = sand.u32 %s111, 1
        %s366 = smul.addr %s365, 128
        %s367 = scalar_lea.vmem [#allocation9], %s366
        // Predicated region
        $region49: #{tpu_custom_call.1} parent=43 // pred_check
          %p368 = pneg %p124
        $region50: #{tpu_custom_call.1} parent=43 // pred_check_branch
          %370 = sbr.rel (%p368) target = $region52
        $region51: #{tpu_custom_call.1} parent=43 // pred_region
          %371 = dma.done %s364, 2048
        $region52: #{tpu_custom_call.1} parent=43 // pred_fallthru
          _
        %s372 = sand.u32 %s26, 1
        %s373 = scalar_lea.sflag [#allocation10], %s372
        %s374 = sand.u32 %s139, 1
        %s375 = smul.addr %s374, 128
        %s376 = scalar_lea.vmem [#allocation11], %s375
        // Predicated region
        $region53: #{tpu_custom_call.1} parent=43 // pred_check
          %p377 = pneg %p152
        $region54: #{tpu_custom_call.1} parent=43 // pred_check_branch
          %379 = sbr.rel (%p377) target = $region56
        $region55: #{tpu_custom_call.1} parent=43 // pred_region
          %380 = dma.done %s373, 2048
        $region56: #{tpu_custom_call.1} parent=43 // pred_fallthru
          _
        %s381 = smul.u32 16, %s32
        %p382 = scmp.lt.s32.totalorder %s31, 1
        %s383 = scalar_select %p382, %s31, 1
        %p384 = scmp.lt.s32.totalorder %s381, 31
        %s385 = scalar_select %p384, %s381, 31
        %s386 = smul.addr %s383, 32
        %s387 = sadd.s32 %s385, %s386
        %s388 = smul.addr %s387, 8
        %s389 = scalar_lea.vmem %s0, %s388
        %p390 = pneg %p68
        %p391 = pneg %p65
        %s392 = sand.u32 %s83, 1
        %s393 = scalar_lea.sflag [#allocation7], %s392
        %s394 = sand.u32 %s83, 1
        %s395 = smul.addr %s394, 128
        %s396 = scalar_lea.vmem [#allocation6], %s395
        %p397 = pneg %p96
        %p398 = pneg %p93
        %s399 = sand.u32 %s26, 1
        %s400 = scalar_lea.sflag [#allocation10], %s399
        %s401 = sand.u32 %s111, 1
        %s402 = smul.addr %s401, 128
        %s403 = scalar_lea.vmem [#allocation9], %s402
        %p404 = pneg %p124
        %p405 = pneg %p121
        %s406 = sand.u32 %s26, 1
        %s407 = scalar_lea.sflag [#allocation10], %s406
        %s408 = sand.u32 %s139, 1
        %s409 = smul.addr %s408, 128
        %s410 = scalar_lea.vmem [#allocation11], %s409
        %p411 = pneg %p152
        %p412 = pneg %p149
        %p413 = scmp.lt.s32.totalorder %s31, 1
        %s414 = scalar_select %p413, %s31, 1
        %s415 = smul.addr %s414, 16
        %s416 = smul.addr %s415, 8
        %s417 = scalar_lea.vmem %s4, %s416
        %p418 = pneg %p178
        %p419 = pneg %p175
        %p420 = scmp.lt.s32.totalorder %s31, 1
        %s421 = scalar_select %p420, %s31, 1
        %s422 = smul.addr %s421, 16
        %s423 = smul.addr %s422, 8
        %s424 = scalar_lea.vmem %s5, %s423
        %p425 = pneg %p204
        %p426 = pneg %p201
        %p427 = pneg %p232
        %p428 = pneg %p229
        %s429 = sand.u32 %s219, 1
        %s430 = scalar_lea.sflag [#allocation8], %s429
        %s431 = sand.u32 %s219, 1
        %s432 = smul.addr %s431, 128
        %s433 = scalar_lea.vmem [#allocation12], %s432
        %s434 = smul.u32 16, %s32
        %p435 = scmp.lt.s32.totalorder %s31, 1
        %s436 = scalar_select %p435, %s31, 1
        %p437 = scmp.lt.s32.totalorder %s434, 31
        %s438 = scalar_select %p437, %s434, 31
        %s439 = smul.addr %s436, 32
        %s440 = sadd.s32 %s438, %s439
        %s441 = smul.addr %s440, 8
        %s442 = scalar_lea.vmem %s0, %s441
        %s443 = smul.u32 16, %s32
        %s444 = smul.u32 16, %s33
        %p445 = scmp.lt.s32.totalorder %s31, 1
        %s446 = scalar_select %p445, %s31, 1
        %s447 = smul.addr %s446, 16
        %s448 = smul.addr %s447, 8
        %s449 = scalar_lea.vmem %s4, %s448
        %p450 = scmp.lt.s32.totalorder %s31, 1
        %s451 = scalar_select %p450, %s31, 1
        %s452 = smul.addr %s451, 16
        %s453 = smul.addr %s452, 8
        %s454 = scalar_lea.vmem %s5, %s453
        %p455 = scmp.eq.s32.totalorder %s33, 0
        // Predicated region
        $region57: #{tpu_custom_call.1} parent=43 // pred_check
          %p456 = pneg %p455
        $region58: #{tpu_custom_call.1} parent=43 // pred_check_branch
          %458 = sbr.rel (%p456) target = $region60
        $region59: #{tpu_custom_call.1} parent=43 // pred_region
          %459 = vst [vmem:[#allocation2] sm:$0x1] -inf
          %460 = vst [vmem:[#allocation3] sm:$0x1] 0.0
          %461 = vst [vmem:[#allocation4] sm:$0xff] 0.0
          %462 = vst [vmem:[#allocation4 + $0x8] sm:$0xff] 0.0
          %463 = vst [vmem:[#allocation4 + $0x10] sm:$0xff] 0.0
          %464 = vst [vmem:[#allocation4 + $0x18] sm:$0xff] 0.0
          %465 = vst [vmem:[#allocation4 + $0x20] sm:$0xff] 0.0
          %466 = vst [vmem:[#allocation4 + $0x28] sm:$0xff] 0.0
          %467 = vst [vmem:[#allocation4 + $0x30] sm:$0xff] 0.0
          %468 = vst [vmem:[#allocation4 + $0x38] sm:$0xff] 0.0
          %469 = vst [vmem:[#allocation4 + $0x40] sm:$0xff] 0.0
          %470 = vst [vmem:[#allocation4 + $0x48] sm:$0xff] 0.0
          %471 = vst [vmem:[#allocation4 + $0x50] sm:$0xff] 0.0
          %472 = vst [vmem:[#allocation4 + $0x58] sm:$0xff] 0.0
          %473 = vst [vmem:[#allocation4 + $0x60] sm:$0xff] 0.0
          %474 = vst [vmem:[#allocation4 + $0x68] sm:$0xff] 0.0
          %475 = vst [vmem:[#allocation4 + $0x70] sm:$0xff] 0.0
          %476 = vst [vmem:[#allocation4 + $0x78] sm:$0xff] 0.0
          %477 = vst [vmem:[#allocation5] sm:$0xff] 0.0
          %478 = vst [vmem:[#allocation5 + $0x8] sm:$0xff] 0.0
          %479 = vst [vmem:[#allocation5 + $0x10] sm:$0xff] 0.0
          %480 = vst [vmem:[#allocation5 + $0x18] sm:$0xff] 0.0
          %481 = vst [vmem:[#allocation5 + $0x20] sm:$0xff] 0.0
          %482 = vst [vmem:[#allocation5 + $0x28] sm:$0xff] 0.0
          %483 = vst [vmem:[#allocation5 + $0x30] sm:$0xff] 0.0
          %484 = vst [vmem:[#allocation5 + $0x38] sm:$0xff] 0.0
          %485 = vst [vmem:[#allocation5 + $0x40] sm:$0xff] 0.0
          %486 = vst [vmem:[#allocation5 + $0x48] sm:$0xff] 0.0
          %487 = vst [vmem:[#allocation5 + $0x50] sm:$0xff] 0.0
          %488 = vst [vmem:[#allocation5 + $0x58] sm:$0xff] 0.0
          %489 = vst [vmem:[#allocation5 + $0x60] sm:$0xff] 0.0
          %490 = vst [vmem:[#allocation5 + $0x68] sm:$0xff] 0.0
          %491 = vst [vmem:[#allocation5 + $0x70] sm:$0xff] 0.0
          %492 = vst [vmem:[#allocation5 + $0x78] sm:$0xff] 0.0
        $region60: #{tpu_custom_call.1} parent=43 // pred_fallthru
          _
        %v493 = vld [vmem:[%s358] sm:$0xff]
        %v494 = vld [vmem:[%s358 + $0x8] sm:$0xff]
        %v495 = vld [vmem:[%s358 + $0x10] sm:$0xff]
        %v496 = vld [vmem:[%s358 + $0x18] sm:$0xff]
        %v497 = vld [vmem:[%s358 + $0x20] sm:$0xff]
        %v498 = vld [vmem:[%s358 + $0x28] sm:$0xff]
        %v499 = vld [vmem:[%s358 + $0x30] sm:$0xff]
        %v500 = vld [vmem:[%s358 + $0x38] sm:$0xff]
        %v501 = vld [vmem:[%s358 + $0x40] sm:$0xff]
        %v502 = vld [vmem:[%s358 + $0x48] sm:$0xff]
        %v503 = vld [vmem:[%s358 + $0x50] sm:$0xff]
        %v504 = vld [vmem:[%s358 + $0x58] sm:$0xff]
        %v505 = vld [vmem:[%s358 + $0x60] sm:$0xff]
        %v506 = vld [vmem:[%s358 + $0x68] sm:$0xff]
        %v507 = vld [vmem:[%s358 + $0x70] sm:$0xff]
        %v508 = vld [vmem:[%s358 + $0x78] sm:$0xff]
        %v509 = vld [vmem:[%s442] sm:$0xff]
        %v510 = vld [vmem:[%s442 + $0x8] sm:$0xff]
        %v511 = vld [vmem:[%s442 + $0x10] sm:$0xff]
        %v512 = vld [vmem:[%s442 + $0x18] sm:$0xff]
        %v513 = vld [vmem:[%s442 + $0x20] sm:$0xff]
        %v514 = vld [vmem:[%s442 + $0x28] sm:$0xff]
        %v515 = vld [vmem:[%s442 + $0x30] sm:$0xff]
        %v516 = vld [vmem:[%s442 + $0x38] sm:$0xff]
        %v517 = vld [vmem:[%s442 + $0x40] sm:$0xff]
        %v518 = vld [vmem:[%s442 + $0x48] sm:$0xff]
        %v519 = vld [vmem:[%s442 + $0x50] sm:$0xff]
        %v520 = vld [vmem:[%s442 + $0x58] sm:$0xff]
        %v521 = vld [vmem:[%s442 + $0x60] sm:$0xff]
        %v522 = vld [vmem:[%s442 + $0x68] sm:$0xff]
        %v523 = vld [vmem:[%s442 + $0x70] sm:$0xff]
        %v524 = vld [vmem:[%s442 + $0x78] sm:$0xff]
        %525 = vmatprep.subr.mxu0 0.0
        %526 = vmatpush1.xpose.msra.mxu0 %v524
        %527 = vmatprep.subr.mxu0 0.0
        %528 = vmatpush1.xpose.msra.mxu0 %v523
        %529 = vmatprep.subr.mxu0 0.0
        %530 = vmatpush1.xpose.msra.mxu0 %v522
        %531 = vmatprep.subr.mxu0 0.0
        %532 = vmatpush1.xpose.msra.mxu0 %v521
        %533 = vmatprep.subr.mxu0 0.0
        %534 = vmatpush1.xpose.msra.mxu0 %v520
        %535 = vmatprep.subr.mxu0 0.0
        %536 = vmatpush1.xpose.msra.mxu0 %v519
        %537 = vmatprep.subr.mxu0 0.0
        %538 = vmatpush1.xpose.msra.mxu0 %v518
        %539 = vmatprep.subr.mxu0 0.0
        %540 = vmatpush1.xpose.msra.mxu0 %v517
        %541 = vmatprep.subr.mxu0 0.0
        %542 = vmatpush1.xpose.msra.mxu0 %v516
        %543 = vmatprep.subr.mxu0 0.0
        %544 = vmatpush1.xpose.msra.mxu0 %v515
        %545 = vmatprep.subr.mxu0 0.0
        %546 = vmatpush1.xpose.msra.mxu0 %v514
        %547 = vmatprep.subr.mxu0 0.0
        %548 = vmatpush1.xpose.msra.mxu0 %v513
        %549 = vmatprep.subr.mxu0 0.0
        %550 = vmatpush1.xpose.msra.mxu0 %v512
        %551 = vmatprep.subr.mxu0 0.0
        %552 = vmatpush1.xpose.msra.mxu0 %v511
        %553 = vmatprep.subr.mxu0 0.0
        %554 = vmatpush1.xpose.msra.mxu0 %v510
        %555 = vmatprep.subr.mxu0 0.0
        %556 = vmatpush1.xpose.msra.mxu0 %v509
        %557 = vmatprep.subr.mxu0 0.0
        %558 = vmatpush2.xpose.msra.mxu0 0.0
        %559 = vmatprep.subr.mxu0 0.0
        %560 = vmatpush2.xpose.msra.mxu0 0.0
        %561 = vmatprep.subr.mxu0 0.0
        %562 = vmatpush2.xpose.msra.mxu0 0.0
        %563 = vmatprep.subr.mxu0 0.0
        %564 = vmatpush2.xpose.msra.mxu0 0.0
        %565 = vmatprep.subr.mxu0 0.0
        %566 = vmatpush2.xpose.msra.mxu0 0.0
        %567 = vmatprep.subr.mxu0 0.0
        %568 = vmatpush2.xpose.msra.mxu0 0.0
        %569 = vmatprep.subr.mxu0 0.0
        %570 = vmatpush2.xpose.msra.mxu0 0.0
        %571 = vmatprep.subr.mxu0 0.0
        %572 = vmatpush2.xpose.msra.mxu0 0.0
        %573 = vmatprep.subr.mxu0 0.0
        %574 = vmatpush2.xpose.msra.mxu0 0.0
        %575 = vmatprep.subr.mxu0 0.0
        %576 = vmatpush2.xpose.msra.mxu0 0.0
        %577 = vmatprep.subr.mxu0 0.0
        %578 = vmatpush2.xpose.msra.mxu0 0.0
        %579 = vmatprep.subr.mxu0 0.0
        %580 = vmatpush2.xpose.msra.mxu0 0.0
        %581 = vmatprep.subr.mxu0 0.0
        %582 = vmatpush2.xpose.msra.mxu0 0.0
        %583 = vmatprep.subr.mxu0 0.0
        %584 = vmatpush2.xpose.msra.mxu0 0.0
        %585 = vmatprep.subr.mxu0 0.0
        %586 = vmatpush2.xpose.msra.mxu0 0.0
        %587 = vmatprep.subr.mxu0 0.0
        %588 = vmatpush2.xpose.msra.mxu0 0.0
        %589 = vmatprep.mubr.f32.mxu0 0.0
        %590 = vmatmul.mubr.f32.gmra.mxu0 %v493
        %v591 = vpop.f32.mrf.mxu0
        %v592 = vadd.f32 0.0, %v591
        %v593 = vpop.f32.mrf.mxu0
        %594 = vmatprep.mubr.f32.mxu0 0.0
        %595 = vmatmul.mubr.f32.gmra.mxu0 %v494
        %v596 = vpop.f32.mrf.mxu0
        %v597 = vadd.f32 0.0, %v596
        %v598 = vpop.f32.mrf.mxu0
        %599 = vmatprep.mubr.f32.mxu0 0.0
        %600 = vmatmul.mubr.f32.gmra.mxu0 %v495
        %v601 = vpop.f32.mrf.mxu0
        %v602 = vadd.f32 0.0, %v601
        %v603 = vpop.f32.mrf.mxu0
        %604 = vmatprep.mubr.f32.mxu0 0.0
        %605 = vmatmul.mubr.f32.gmra.mxu0 %v496
        %v606 = vpop.f32.mrf.mxu0
        %v607 = vadd.f32 0.0, %v606
        %v608 = vpop.f32.mrf.mxu0
        %609 = vmatprep.mubr.f32.mxu0 0.0
        %610 = vmatmul.mubr.f32.gmra.mxu0 %v497
        %v611 = vpop.f32.mrf.mxu0
        %v612 = vadd.f32 0.0, %v611
        %v613 = vpop.f32.mrf.mxu0
        %614 = vmatprep.mubr.f32.mxu0 0.0
        %615 = vmatmul.mubr.f32.gmra.mxu0 %v498
        %v616 = vpop.f32.mrf.mxu0
        %v617 = vadd.f32 0.0, %v616
        %v618 = vpop.f32.mrf.mxu0
        %619 = vmatprep.mubr.f32.mxu0 0.0
        %620 = vmatmul.mubr.f32.gmra.mxu0 %v499
        %v621 = vpop.f32.mrf.mxu0
        %v622 = vadd.f32 0.0, %v621
        %v623 = vpop.f32.mrf.mxu0
        %624 = vmatprep.mubr.f32.mxu0 0.0
        %625 = vmatmul.mubr.f32.gmra.mxu0 %v500
        %v626 = vpop.f32.mrf.mxu0
        %v627 = vadd.f32 0.0, %v626
        %v628 = vpop.f32.mrf.mxu0
        %629 = vmatprep.mubr.f32.mxu0 0.0
        %630 = vmatmul.mubr.f32.gmra.mxu0 %v501
        %v631 = vpop.f32.mrf.mxu0
        %v632 = vadd.f32 0.0, %v631
        %v633 = vpop.f32.mrf.mxu0
        %634 = vmatprep.mubr.f32.mxu0 0.0
        %635 = vmatmul.mubr.f32.gmra.mxu0 %v502
        %v636 = vpop.f32.mrf.mxu0
        %v637 = vadd.f32 0.0, %v636
        %v638 = vpop.f32.mrf.mxu0
        %639 = vmatprep.mubr.f32.mxu0 0.0
        %640 = vmatmul.mubr.f32.gmra.mxu0 %v503
        %v641 = vpop.f32.mrf.mxu0
        %v642 = vadd.f32 0.0, %v641
        %v643 = vpop.f32.mrf.mxu0
        %644 = vmatprep.mubr.f32.mxu0 0.0
        %645 = vmatmul.mubr.f32.gmra.mxu0 %v504
        %v646 = vpop.f32.mrf.mxu0
        %v647 = vadd.f32 0.0, %v646
        %v648 = vpop.f32.mrf.mxu0
        %649 = vmatprep.mubr.f32.mxu0 0.0
        %650 = vmatmul.mubr.f32.gmra.mxu0 %v505
        %v651 = vpop.f32.mrf.mxu0
        %v652 = vadd.f32 0.0, %v651
        %v653 = vpop.f32.mrf.mxu0
        %654 = vmatprep.mubr.f32.mxu0 0.0
        %655 = vmatmul.mubr.f32.gmra.mxu0 %v506
        %v656 = vpop.f32.mrf.mxu0
        %v657 = vadd.f32 0.0, %v656
        %v658 = vpop.f32.mrf.mxu0
        %659 = vmatprep.mubr.f32.mxu0 0.0
        %660 = vmatmul.mubr.f32.gmra.mxu0 %v507
        %v661 = vpop.f32.mrf.mxu0
        %v662 = vadd.f32 0.0, %v661
        %v663 = vpop.f32.mrf.mxu0
        %664 = vmatprep.mubr.f32.mxu0 0.0
        %665 = vmatmul.mubr.f32.gmra.mxu0 %v508
        %v666 = vpop.f32.mrf.mxu0
        %v667 = vadd.f32 0.0, %v666
        %v668 = vpop.f32.mrf.mxu0
        %669 = vdwg.mxu0
        %v670 = vld [vmem:[#allocation2] sm:$0x1]
        %v671 = vmax.f32 %v592, %v612
        %v672 = vmax.f32 %v597, %v617
        %v673 = vmax.f32 %v602, %v622
        %v674 = vmax.f32 %v607, %v627
        %v675 = vmax.f32 %v671, %v632
        %v676 = vmax.f32 %v672, %v637
        %v677 = vmax.f32 %v673, %v642
        %v678 = vmax.f32 %v674, %v647
        %v679 = vmax.f32 %v675, %v652
        %v680 = vmax.f32 %v676, %v657
        %v681 = vmax.f32 %v677, %v662
        %v682 = vmax.f32 %v678, %v667
        %v683 = vmax.f32 %v679, %v680
        %v684 = vmax.f32 %v681, %v682
        %v685 = vmax.f32 %v683, %v684
        %v686 = vrot.slane %v685, 4
        %v687 = vmax.f32 %v685, %v686
        %v688 = vrot.slane %v687, 2
        %v689 = vmax.f32 %v687, %v688
        %v690 = vrot.slane %v689, 1
        %v691 = vmax.f32 %v689, %v690
        %v692 = vmax.f32 %v670, %v691
        %v693 = vsub.f32 %v670, %v692
        %v694 = vmul.f32 %v693, 1.442695
        %v695 = vpow.pop %v694
        %v697 = vlaneseq
        %v698 = vshrl.u32 %v697, 7
        %v699 = vsub.s32 0, %v698
        %v700 = vrot.slane %v692, %v699
        %v702 = vsub.f32 %v592, %v700
        %v703 = vsub.f32 %v597, %v700
        %v704 = vsub.f32 %v602, %v700
        %v705 = vsub.f32 %v607, %v700
        %v706 = vsub.f32 %v612, %v700
        %v707 = vsub.f32 %v617, %v700
        %v708 = vsub.f32 %v622, %v700
        %v709 = vsub.f32 %v627, %v700
        %v710 = vsub.f32 %v632, %v700
        %v711 = vsub.f32 %v637, %v700
        %v712 = vsub.f32 %v642, %v700
        %v713 = vsub.f32 %v647, %v700
        %v714 = vsub.f32 %v652, %v700
        %v715 = vsub.f32 %v657, %v700
        %v716 = vsub.f32 %v662, %v700
        %v717 = vsub.f32 %v667, %v700
        %v718 = vmul.f32 %v702, 1.442695
        %v719 = vpow.pop %v718
        %v720 = vmul.f32 %v703, 1.442695
        %v721 = vpow.pop %v720
        %v722 = vmul.f32 %v704, 1.442695
        %v723 = vpow.pop %v722
        %v724 = vmul.f32 %v705, 1.442695
        %v725 = vpow.pop %v724
        %v726 = vmul.f32 %v706, 1.442695
        %v727 = vpow.pop %v726
        %v728 = vmul.f32 %v707, 1.442695
        %v729 = vpow.pop %v728
        %v730 = vmul.f32 %v708, 1.442695
        %v731 = vpow.pop %v730
        %v732 = vmul.f32 %v709, 1.442695
        %v733 = vpow.pop %v732
        %v734 = vmul.f32 %v710, 1.442695
        %v735 = vpow.pop %v734
        %v736 = vmul.f32 %v711, 1.442695
        %v737 = vpow.pop %v736
        %v738 = vmul.f32 %v712, 1.442695
        %v739 = vpow.pop %v738
        %v740 = vmul.f32 %v713, 1.442695
        %v741 = vpow.pop %v740
        %v742 = vmul.f32 %v714, 1.442695
        %v743 = vpow.pop %v742
        %v744 = vmul.f32 %v715, 1.442695
        %v745 = vpow.pop %v744
        %v746 = vmul.f32 %v716, 1.442695
        %v747 = vpow.pop %v746
        %v748 = vmul.f32 %v717, 1.442695
        %v749 = vpow.pop %v748
        %v750 = vld [vmem:[#allocation3] sm:$0x1]
        %v751 = vmul.f32 %v695, %v750
        %v752 = vadd.f32 %v719, %v721
        %v753 = vadd.f32 %v752, %v723
        %v754 = vadd.f32 %v753, %v725
        %v755 = vadd.f32 %v754, %v727
        %v756 = vadd.f32 %v755, %v729
        %v757 = vadd.f32 %v756, %v731
        %v758 = vadd.f32 %v757, %v733
        %v759 = vadd.f32 %v758, %v735
        %v760 = vadd.f32 %v759, %v737
        %v761 = vadd.f32 %v760, %v739
        %v762 = vadd.f32 %v761, %v741
        %v763 = vadd.f32 %v762, %v743
        %v764 = vadd.f32 %v763, %v745
        %v765 = vadd.f32 %v764, %v747
        %v766 = vadd.f32 %v765, %v749
        %v767 = vrot.slane %v766, 4
        %v768 = vadd.f32 %v766, %v767
        %v769 = vrot.slane %v768, 2
        %v770 = vadd.f32 %v768, %v769
        %v771 = vrot.slane %v770, 1
        %v772 = vadd.f32 %v770, %v771
        %v773 = vadd.f32 %v751, %v772
        %774 = vst [vmem:[#allocation3] sm:$0x1] %v773
        %775 = vst [vmem:[#allocation2] sm:$0x1] %v692
        %v776 = vld [vmem:[%s367] sm:$0xff]
        %v777 = vld [vmem:[%s367 + $0x8] sm:$0xff]
        %v778 = vld [vmem:[%s367 + $0x10] sm:$0xff]
        %v779 = vld [vmem:[%s367 + $0x18] sm:$0xff]
        %v780 = vld [vmem:[%s367 + $0x20] sm:$0xff]
        %v781 = vld [vmem:[%s367 + $0x28] sm:$0xff]
        %v782 = vld [vmem:[%s367 + $0x30] sm:$0xff]
        %v783 = vld [vmem:[%s367 + $0x38] sm:$0xff]
        %v784 = vld [vmem:[%s367 + $0x40] sm:$0xff]
        %v785 = vld [vmem:[%s367 + $0x48] sm:$0xff]
        %v786 = vld [vmem:[%s367 + $0x50] sm:$0xff]
        %v787 = vld [vmem:[%s367 + $0x58] sm:$0xff]
        %v788 = vld [vmem:[%s367 + $0x60] sm:$0xff]
        %v789 = vld [vmem:[%s367 + $0x68] sm:$0xff]
        %v790 = vld [vmem:[%s367 + $0x70] sm:$0xff]
        %v791 = vld [vmem:[%s367 + $0x78] sm:$0xff]
        %v792 = vld [vmem:[#allocation4] sm:$0xff]
        %v793 = vld [vmem:[#allocation4 + $0x8] sm:$0xff]
        %v794 = vld [vmem:[#allocation4 + $0x10] sm:$0xff]
        %v795 = vld [vmem:[#allocation4 + $0x18] sm:$0xff]
        %v796 = vld [vmem:[#allocation4 + $0x20] sm:$0xff]
        %v797 = vld [vmem:[#allocation4 + $0x28] sm:$0xff]
        %v798 = vld [vmem:[#allocation4 + $0x30] sm:$0xff]
        %v799 = vld [vmem:[#allocation4 + $0x38] sm:$0xff]
        %v800 = vld [vmem:[#allocation4 + $0x40] sm:$0xff]
        %v801 = vld [vmem:[#allocation4 + $0x48] sm:$0xff]
        %v802 = vld [vmem:[#allocation4 + $0x50] sm:$0xff]
        %v803 = vld [vmem:[#allocation4 + $0x58] sm:$0xff]
        %v804 = vld [vmem:[#allocation4 + $0x60] sm:$0xff]
        %v805 = vld [vmem:[#allocation4 + $0x68] sm:$0xff]
        %v806 = vld [vmem:[#allocation4 + $0x70] sm:$0xff]
        %v807 = vld [vmem:[#allocation4 + $0x78] sm:$0xff]
        %v809 = vlaneseq
        %v810 = vshrl.u32 %v809, 7
        %v811 = vsub.s32 0, %v810
        %v812 = vrot.slane %v695, %v811
        %v814 = vmul.f32 %v812, %v792
        %v815 = vmul.f32 %v812, %v793
        %v816 = vmul.f32 %v812, %v794
        %v817 = vmul.f32 %v812, %v795
        %v818 = vmul.f32 %v812, %v796
        %v819 = vmul.f32 %v812, %v797
        %v820 = vmul.f32 %v812, %v798
        %v821 = vmul.f32 %v812, %v799
        %v822 = vmul.f32 %v812, %v800
        %v823 = vmul.f32 %v812, %v801
        %v824 = vmul.f32 %v812, %v802
        %v825 = vmul.f32 %v812, %v803
        %v826 = vmul.f32 %v812, %v804
        %v827 = vmul.f32 %v812, %v805
        %v828 = vmul.f32 %v812, %v806
        %v829 = vmul.f32 %v812, %v807
        %830 = vmatprep.subr.mxu0 0.0
        %831 = vmatpush1.msra.mxu0 %v749
        %832 = vmatprep.subr.mxu0 0.0
        %833 = vmatpush1.msra.mxu0 %v747
        %834 = vmatprep.subr.mxu0 0.0
        %835 = vmatpush1.msra.mxu0 %v745
        %836 = vmatprep.subr.mxu0 0.0
        %837 = vmatpush1.msra.mxu0 %v743
        %838 = vmatprep.subr.mxu0 0.0
        %839 = vmatpush1.msra.mxu0 %v741
        %840 = vmatprep.subr.mxu0 0.0
        %841 = vmatpush1.msra.mxu0 %v739
        %842 = vmatprep.subr.mxu0 0.0
        %843 = vmatpush1.msra.mxu0 %v737
        %844 = vmatprep.subr.mxu0 0.0
        %845 = vmatpush1.msra.mxu0 %v735
        %846 = vmatprep.subr.mxu0 0.0
        %847 = vmatpush1.msra.mxu0 %v733
        %848 = vmatprep.subr.mxu0 0.0
        %849 = vmatpush1.msra.mxu0 %v731
        %850 = vmatprep.subr.mxu0 0.0
        %851 = vmatpush1.msra.mxu0 %v729
        %852 = vmatprep.subr.mxu0 0.0
        %853 = vmatpush1.msra.mxu0 %v727
        %854 = vmatprep.subr.mxu0 0.0
        %855 = vmatpush1.msra.mxu0 %v725
        %856 = vmatprep.subr.mxu0 0.0
        %857 = vmatpush1.msra.mxu0 %v723
        %858 = vmatprep.subr.mxu0 0.0
        %859 = vmatpush1.msra.mxu0 %v721
        %860 = vmatprep.subr.mxu0 0.0
        %861 = vmatpush1.msra.mxu0 %v719
        %862 = vmatprep.subr.mxu0 0.0
        %863 = vmatpush2.msra.mxu0 0.0
        %864 = vmatprep.subr.mxu0 0.0
        %865 = vmatpush2.msra.mxu0 0.0
        %866 = vmatprep.subr.mxu0 0.0
        %867 = vmatpush2.msra.mxu0 0.0
        %868 = vmatprep.subr.mxu0 0.0
        %869 = vmatpush2.msra.mxu0 0.0
        %870 = vmatprep.subr.mxu0 0.0
        %871 = vmatpush2.msra.mxu0 0.0
        %872 = vmatprep.subr.mxu0 0.0
        %873 = vmatpush2.msra.mxu0 0.0
        %874 = vmatprep.subr.mxu0 0.0
        %875 = vmatpush2.msra.mxu0 0.0
        %876 = vmatprep.subr.mxu0 0.0
        %877 = vmatpush2.msra.mxu0 0.0
        %878 = vmatprep.subr.mxu0 0.0
        %879 = vmatpush2.msra.mxu0 0.0
        %880 = vmatprep.subr.mxu0 0.0
        %881 = vmatpush2.msra.mxu0 0.0
        %882 = vmatprep.subr.mxu0 0.0
        %883 = vmatpush2.msra.mxu0 0.0
        %884 = vmatprep.subr.mxu0 0.0
        %885 = vmatpush2.msra.mxu0 0.0
        %886 = vmatprep.subr.mxu0 0.0
        %887 = vmatpush2.msra.mxu0 0.0
        %888 = vmatprep.subr.mxu0 0.0
        %889 = vmatpush2.msra.mxu0 0.0
        %890 = vmatprep.subr.mxu0 0.0
        %891 = vmatpush2.msra.mxu0 0.0
        %892 = vmatprep.subr.mxu0 0.0
        %893 = vmatpush2.msra.mxu0 0.0
        %894 = vmatprep.mubr.f32.mxu0 0.0
        %895 = vmatmul.mubr.f32.gmra.mxu0 %v776
        %v896 = vpop.f32.mrf.mxu0
        %v897 = vadd.f32 0.0, %v896
        %v898 = vpop.f32.mrf.mxu0
        %899 = vmatprep.mubr.f32.mxu0 0.0
        %900 = vmatmul.mubr.f32.gmra.mxu0 %v777
        %v901 = vpop.f32.mrf.mxu0
        %v902 = vadd.f32 0.0, %v901
        %v903 = vpop.f32.mrf.mxu0
        %904 = vmatprep.mubr.f32.mxu0 0.0
        %905 = vmatmul.mubr.f32.gmra.mxu0 %v778
        %v906 = vpop.f32.mrf.mxu0
        %v907 = vadd.f32 0.0, %v906
        %v908 = vpop.f32.mrf.mxu0
        %909 = vmatprep.mubr.f32.mxu0 0.0
        %910 = vmatmul.mubr.f32.gmra.mxu0 %v779
        %v911 = vpop.f32.mrf.mxu0
        %v912 = vadd.f32 0.0, %v911
        %v913 = vpop.f32.mrf.mxu0
        %914 = vmatprep.mubr.f32.mxu0 0.0
        %915 = vmatmul.mubr.f32.gmra.mxu0 %v780
        %v916 = vpop.f32.mrf.mxu0
        %v917 = vadd.f32 0.0, %v916
        %v918 = vpop.f32.mrf.mxu0
        %919 = vmatprep.mubr.f32.mxu0 0.0
        %920 = vmatmul.mubr.f32.gmra.mxu0 %v781
        %v921 = vpop.f32.mrf.mxu0
        %v922 = vadd.f32 0.0, %v921
        %v923 = vpop.f32.mrf.mxu0
        %924 = vmatprep.mubr.f32.mxu0 0.0
        %925 = vmatmul.mubr.f32.gmra.mxu0 %v782
        %v926 = vpop.f32.mrf.mxu0
        %v927 = vadd.f32 0.0, %v926
        %v928 = vpop.f32.mrf.mxu0
        %929 = vmatprep.mubr.f32.mxu0 0.0
        %930 = vmatmul.mubr.f32.gmra.mxu0 %v783
        %v931 = vpop.f32.mrf.mxu0
        %v932 = vadd.f32 0.0, %v931
        %v933 = vpop.f32.mrf.mxu0
        %934 = vmatprep.mubr.f32.mxu0 0.0
        %935 = vmatmul.mubr.f32.gmra.mxu0 %v784
        %v936 = vpop.f32.mrf.mxu0
        %v937 = vadd.f32 0.0, %v936
        %v938 = vpop.f32.mrf.mxu0
        %939 = vmatprep.mubr.f32.mxu0 0.0
        %940 = vmatmul.mubr.f32.gmra.mxu0 %v785
        %v941 = vpop.f32.mrf.mxu0
        %v942 = vadd.f32 0.0, %v941
        %v943 = vpop.f32.mrf.mxu0
        %944 = vmatprep.mubr.f32.mxu0 0.0
        %945 = vmatmul.mubr.f32.gmra.mxu0 %v786
        %v946 = vpop.f32.mrf.mxu0
        %v947 = vadd.f32 0.0, %v946
        %v948 = vpop.f32.mrf.mxu0
        %949 = vmatprep.mubr.f32.mxu0 0.0
        %950 = vmatmul.mubr.f32.gmra.mxu0 %v787
        %v951 = vpop.f32.mrf.mxu0
        %v952 = vadd.f32 0.0, %v951
        %v953 = vpop.f32.mrf.mxu0
        %954 = vmatprep.mubr.f32.mxu0 0.0
        %955 = vmatmul.mubr.f32.gmra.mxu0 %v788
        %v956 = vpop.f32.mrf.mxu0
        %v957 = vadd.f32 0.0, %v956
        %v958 = vpop.f32.mrf.mxu0
        %959 = vmatprep.mubr.f32.mxu0 0.0
        %960 = vmatmul.mubr.f32.gmra.mxu0 %v789
        %v961 = vpop.f32.mrf.mxu0
        %v962 = vadd.f32 0.0, %v961
        %v963 = vpop.f32.mrf.mxu0
        %964 = vmatprep.mubr.f32.mxu0 0.0
        %965 = vmatmul.mubr.f32.gmra.mxu0 %v790
        %v966 = vpop.f32.mrf.mxu0
        %v967 = vadd.f32 0.0, %v966
        %v968 = vpop.f32.mrf.mxu0
        %969 = vmatprep.mubr.f32.mxu0 0.0
        %970 = vmatmul.mubr.f32.gmra.mxu0 %v791
        %v971 = vpop.f32.mrf.mxu0
        %v972 = vadd.f32 0.0, %v971
        %v973 = vpop.f32.mrf.mxu0
        %974 = vdwg.mxu0
        %v975 = vadd.f32 %v814, %v897
        %v976 = vadd.f32 %v815, %v902
        %v977 = vadd.f32 %v816, %v907
        %v978 = vadd.f32 %v817, %v912
        %v979 = vadd.f32 %v818, %v917
        %v980 = vadd.f32 %v819, %v922
        %v981 = vadd.f32 %v820, %v927
        %v982 = vadd.f32 %v821, %v932
        %v983 = vadd.f32 %v822, %v937
        %v984 = vadd.f32 %v823, %v942
        %v985 = vadd.f32 %v824, %v947
        %v986 = vadd.f32 %v825, %v952
        %v987 = vadd.f32 %v826, %v957
        %v988 = vadd.f32 %v827, %v962
        %v989 = vadd.f32 %v828, %v967
        %v990 = vadd.f32 %v829, %v972
        %991 = vst [vmem:[#allocation4] sm:$0xff] %v975
        %992 = vst [vmem:[#allocation4 + $0x8] sm:$0xff] %v976
        %993 = vst [vmem:[#allocation4 + $0x10] sm:$0xff] %v977
        %994 = vst [vmem:[#allocation4 + $0x18] sm:$0xff] %v978
        %995 = vst [vmem:[#allocation4 + $0x20] sm:$0xff] %v979
        %996 = vst [vmem:[#allocation4 + $0x28] sm:$0xff] %v980
        %997 = vst [vmem:[#allocation4 + $0x30] sm:$0xff] %v981
        %998 = vst [vmem:[#allocation4 + $0x38] sm:$0xff] %v982
        %999 = vst [vmem:[#allocation4 + $0x40] sm:$0xff] %v983
        %1000 = vst [vmem:[#allocation4 + $0x48] sm:$0xff] %v984
        %1001 = vst [vmem:[#allocation4 + $0x50] sm:$0xff] %v985
        %1002 = vst [vmem:[#allocation4 + $0x58] sm:$0xff] %v986
        %1003 = vst [vmem:[#allocation4 + $0x60] sm:$0xff] %v987
        %1004 = vst [vmem:[#allocation4 + $0x68] sm:$0xff] %v988
        %1005 = vst [vmem:[#allocation4 + $0x70] sm:$0xff] %v989
        %1006 = vst [vmem:[#allocation4 + $0x78] sm:$0xff] %v990
        %v1007 = vld [vmem:[#allocation5] sm:$0xff]
        %v1008 = vld [vmem:[#allocation5 + $0x8] sm:$0xff]
        %v1009 = vld [vmem:[#allocation5 + $0x10] sm:$0xff]
        %v1010 = vld [vmem:[#allocation5 + $0x18] sm:$0xff]
        %v1011 = vld [vmem:[#allocation5 + $0x20] sm:$0xff]
        %v1012 = vld [vmem:[#allocation5 + $0x28] sm:$0xff]
        %v1013 = vld [vmem:[#allocation5 + $0x30] sm:$0xff]
        %v1014 = vld [vmem:[#allocation5 + $0x38] sm:$0xff]
        %v1015 = vld [vmem:[#allocation5 + $0x40] sm:$0xff]
        %v1016 = vld [vmem:[#allocation5 + $0x48] sm:$0xff]
        %v1017 = vld [vmem:[#allocation5 + $0x50] sm:$0xff]
        %v1018 = vld [vmem:[#allocation5 + $0x58] sm:$0xff]
        %v1019 = vld [vmem:[#allocation5 + $0x60] sm:$0xff]
        %v1020 = vld [vmem:[#allocation5 + $0x68] sm:$0xff]
        %v1021 = vld [vmem:[#allocation5 + $0x70] sm:$0xff]
        %v1022 = vld [vmem:[#allocation5 + $0x78] sm:$0xff]
        %v1023 = vmul.f32 %v812, %v1007
        %v1024 = vmul.f32 %v812, %v1008
        %v1025 = vmul.f32 %v812, %v1009
        %v1026 = vmul.f32 %v812, %v1010
        %v1027 = vmul.f32 %v812, %v1011
        %v1028 = vmul.f32 %v812, %v1012
        %v1029 = vmul.f32 %v812, %v1013
        %v1030 = vmul.f32 %v812, %v1014
        %v1031 = vmul.f32 %v812, %v1015
        %v1032 = vmul.f32 %v812, %v1016
        %v1033 = vmul.f32 %v812, %v1017
        %v1034 = vmul.f32 %v812, %v1018
        %v1035 = vmul.f32 %v812, %v1019
        %v1036 = vmul.f32 %v812, %v1020
        %v1037 = vmul.f32 %v812, %v1021
        %v1038 = vmul.f32 %v812, %v1022
        %v1039 = vmul.f32 %v776, %v776
        %v1040 = vmul.f32 %v777, %v777
        %v1041 = vmul.f32 %v778, %v778
        %v1042 = vmul.f32 %v779, %v779
        %v1043 = vmul.f32 %v780, %v780
        %v1044 = vmul.f32 %v781, %v781
        %v1045 = vmul.f32 %v782, %v782
        %v1046 = vmul.f32 %v783, %v783
        %v1047 = vmul.f32 %v784, %v784
        %v1048 = vmul.f32 %v785, %v785
        %v1049 = vmul.f32 %v786, %v786
        %v1050 = vmul.f32 %v787, %v787
        %v1051 = vmul.f32 %v788, %v788
        %v1052 = vmul.f32 %v789, %v789
        %v1053 = vmul.f32 %v790, %v790
        %v1054 = vmul.f32 %v791, %v791
        %1055 = vmatprep.subr.mxu0 0.0
        %1056 = vmatpush1.msra.mxu0 %v749
        %1057 = vmatprep.subr.mxu0 0.0
        %1058 = vmatpush1.msra.mxu0 %v747
        %1059 = vmatprep.subr.mxu0 0.0
        %1060 = vmatpush1.msra.mxu0 %v745
        %1061 = vmatprep.subr.mxu0 0.0
        %1062 = vmatpush1.msra.mxu0 %v743
        %1063 = vmatprep.subr.mxu0 0.0
        %1064 = vmatpush1.msra.mxu0 %v741
        %1065 = vmatprep.subr.mxu0 0.0
        %1066 = vmatpush1.msra.mxu0 %v739
        %1067 = vmatprep.subr.mxu0 0.0
        %1068 = vmatpush1.msra.mxu0 %v737
        %1069 = vmatprep.subr.mxu0 0.0
        %1070 = vmatpush1.msra.mxu0 %v735
        %1071 = vmatprep.subr.mxu0 0.0
        %1072 = vmatpush1.msra.mxu0 %v733
        %1073 = vmatprep.subr.mxu0 0.0
        %1074 = vmatpush1.msra.mxu0 %v731
        %1075 = vmatprep.subr.mxu0 0.0
        %1076 = vmatpush1.msra.mxu0 %v729
        %1077 = vmatprep.subr.mxu0 0.0
        %1078 = vmatpush1.msra.mxu0 %v727
        %1079 = vmatprep.subr.mxu0 0.0
        %1080 = vmatpush1.msra.mxu0 %v725
        %1081 = vmatprep.subr.mxu0 0.0
        %1082 = vmatpush1.msra.mxu0 %v723
        %1083 = vmatprep.subr.mxu0 0.0
        %1084 = vmatpush1.msra.mxu0 %v721
        %1085 = vmatprep.subr.mxu0 0.0
        %1086 = vmatpush1.msra.mxu0 %v719
        %1087 = vmatprep.subr.mxu0 0.0
        %1088 = vmatpush2.msra.mxu0 0.0
        %1089 = vmatprep.subr.mxu0 0.0
        %1090 = vmatpush2.msra.mxu0 0.0
        %1091 = vmatprep.subr.mxu0 0.0
        %1092 = vmatpush2.msra.mxu0 0.0
        %1093 = vmatprep.subr.mxu0 0.0
        %1094 = vmatpush2.msra.mxu0 0.0
        %1095 = vmatprep.subr.mxu0 0.0
        %1096 = vmatpush2.msra.mxu0 0.0
        %1097 = vmatprep.subr.mxu0 0.0
        %1098 = vmatpush2.msra.mxu0 0.0
        %1099 = vmatprep.subr.mxu0 0.0
        %1100 = vmatpush2.msra.mxu0 0.0
        %1101 = vmatprep.subr.mxu0 0.0
        %1102 = vmatpush2.msra.mxu0 0.0
        %1103 = vmatprep.subr.mxu0 0.0
        %1104 = vmatpush2.msra.mxu0 0.0
        %1105 = vmatprep.subr.mxu0 0.0
        %1106 = vmatpush2.msra.mxu0 0.0
        %1107 = vmatprep.subr.mxu0 0.0
        %1108 = vmatpush2.msra.mxu0 0.0
        %1109 = vmatprep.subr.mxu0 0.0
        %1110 = vmatpush2.msra.mxu0 0.0
        %1111 = vmatprep.subr.mxu0 0.0
        %1112 = vmatpush2.msra.mxu0 0.0
        %1113 = vmatprep.subr.mxu0 0.0
        %1114 = vmatpush2.msra.mxu0 0.0
        %1115 = vmatprep.subr.mxu0 0.0
        %1116 = vmatpush2.msra.mxu0 0.0
        %1117 = vmatprep.subr.mxu0 0.0
        %1118 = vmatpush2.msra.mxu0 0.0
        %1119 = vmatprep.mubr.f32.mxu0 0.0
        %1120 = vmatmul.mubr.f32.gmra.mxu0 %v1039
        %v1121 = vpop.f32.mrf.mxu0
        %v1122 = vadd.f32 0.0, %v1121
        %v1123 = vpop.f32.mrf.mxu0
        %1124 = vmatprep.mubr.f32.mxu0 0.0
        %1125 = vmatmul.mubr.f32.gmra.mxu0 %v1040
        %v1126 = vpop.f32.mrf.mxu0
        %v1127 = vadd.f32 0.0, %v1126
        %v1128 = vpop.f32.mrf.mxu0
        %1129 = vmatprep.mubr.f32.mxu0 0.0
        %1130 = vmatmul.mubr.f32.gmra.mxu0 %v1041
        %v1131 = vpop.f32.mrf.mxu0
        %v1132 = vadd.f32 0.0, %v1131
        %v1133 = vpop.f32.mrf.mxu0
        %1134 = vmatprep.mubr.f32.mxu0 0.0
        %1135 = vmatmul.mubr.f32.gmra.mxu0 %v1042
        %v1136 = vpop.f32.mrf.mxu0
        %v1137 = vadd.f32 0.0, %v1136
        %v1138 = vpop.f32.mrf.mxu0
        %1139 = vmatprep.mubr.f32.mxu0 0.0
        %1140 = vmatmul.mubr.f32.gmra.mxu0 %v1043
        %v1141 = vpop.f32.mrf.mxu0
        %v1142 = vadd.f32 0.0, %v1141
        %v1143 = vpop.f32.mrf.mxu0
        %1144 = vmatprep.mubr.f32.mxu0 0.0
        %1145 = vmatmul.mubr.f32.gmra.mxu0 %v1044
        %v1146 = vpop.f32.mrf.mxu0
        %v1147 = vadd.f32 0.0, %v1146
        %v1148 = vpop.f32.mrf.mxu0
        %1149 = vmatprep.mubr.f32.mxu0 0.0
        %1150 = vmatmul.mubr.f32.gmra.mxu0 %v1045
        %v1151 = vpop.f32.mrf.mxu0
        %v1152 = vadd.f32 0.0, %v1151
        %v1153 = vpop.f32.mrf.mxu0
        %1154 = vmatprep.mubr.f32.mxu0 0.0
        %1155 = vmatmul.mubr.f32.gmra.mxu0 %v1046
        %v1156 = vpop.f32.mrf.mxu0
        %v1157 = vadd.f32 0.0, %v1156
        %v1158 = vpop.f32.mrf.mxu0
        %1159 = vmatprep.mubr.f32.mxu0 0.0
        %1160 = vmatmul.mubr.f32.gmra.mxu0 %v1047
        %v1161 = vpop.f32.mrf.mxu0
        %v1162 = vadd.f32 0.0, %v1161
        %v1163 = vpop.f32.mrf.mxu0
        %1164 = vmatprep.mubr.f32.mxu0 0.0
        %1165 = vmatmul.mubr.f32.gmra.mxu0 %v1048
        %v1166 = vpop.f32.mrf.mxu0
        %v1167 = vadd.f32 0.0, %v1166
        %v1168 = vpop.f32.mrf.mxu0
        %1169 = vmatprep.mubr.f32.mxu0 0.0
        %1170 = vmatmul.mubr.f32.gmra.mxu0 %v1049
        %v1171 = vpop.f32.mrf.mxu0
        %v1172 = vadd.f32 0.0, %v1171
        %v1173 = vpop.f32.mrf.mxu0
        %1174 = vmatprep.mubr.f32.mxu0 0.0
        %1175 = vmatmul.mubr.f32.gmra.mxu0 %v1050
        %v1176 = vpop.f32.mrf.mxu0
        %v1177 = vadd.f32 0.0, %v1176
        %v1178 = vpop.f32.mrf.mxu0
        %1179 = vmatprep.mubr.f32.mxu0 0.0
        %1180 = vmatmul.mubr.f32.gmra.mxu0 %v1051
        %v1181 = vpop.f32.mrf.mxu0
        %v1182 = vadd.f32 0.0, %v1181
        %v1183 = vpop.f32.mrf.mxu0
        %1184 = vmatprep.mubr.f32.mxu0 0.0
        %1185 = vmatmul.mubr.f32.gmra.mxu0 %v1052
        %v1186 = vpop.f32.mrf.mxu0
        %v1187 = vadd.f32 0.0, %v1186
        %v1188 = vpop.f32.mrf.mxu0
        %1189 = vmatprep.mubr.f32.mxu0 0.0
        %1190 = vmatmul.mubr.f32.gmra.mxu0 %v1053
        %v1191 = vpop.f32.mrf.mxu0
        %v1192 = vadd.f32 0.0, %v1191
        %v1193 = vpop.f32.mrf.mxu0
        %1194 = vmatprep.mubr.f32.mxu0 0.0
        %1195 = vmatmul.mubr.f32.gmra.mxu0 %v1054
        %v1196 = vpop.f32.mrf.mxu0
        %v1197 = vadd.f32 0.0, %v1196
        %v1198 = vpop.f32.mrf.mxu0
        %1199 = vdwg.mxu0
        %v1200 = vadd.f32 %v1023, %v1122
        %v1201 = vadd.f32 %v1024, %v1127
        %v1202 = vadd.f32 %v1025, %v1132
        %v1203 = vadd.f32 %v1026, %v1137
        %v1204 = vadd.f32 %v1027, %v1142
        %v1205 = vadd.f32 %v1028, %v1147
        %v1206 = vadd.f32 %v1029, %v1152
        %v1207 = vadd.f32 %v1030, %v1157
        %v1208 = vadd.f32 %v1031, %v1162
        %v1209 = vadd.f32 %v1032, %v1167
        %v1210 = vadd.f32 %v1033, %v1172
        %v1211 = vadd.f32 %v1034, %v1177
        %v1212 = vadd.f32 %v1035, %v1182
        %v1213 = vadd.f32 %v1036, %v1187
        %v1214 = vadd.f32 %v1037, %v1192
        %v1215 = vadd.f32 %v1038, %v1197
        %1216 = vst [vmem:[#allocation5] sm:$0xff] %v1200
        %1217 = vst [vmem:[#allocation5 + $0x8] sm:$0xff] %v1201
        %1218 = vst [vmem:[#allocation5 + $0x10] sm:$0xff] %v1202
        %1219 = vst [vmem:[#allocation5 + $0x18] sm:$0xff] %v1203
        %1220 = vst [vmem:[#allocation5 + $0x20] sm:$0xff] %v1204
        %1221 = vst [vmem:[#allocation5 + $0x28] sm:$0xff] %v1205
        %1222 = vst [vmem:[#allocation5 + $0x30] sm:$0xff] %v1206
        %1223 = vst [vmem:[#allocation5 + $0x38] sm:$0xff] %v1207
        %1224 = vst [vmem:[#allocation5 + $0x40] sm:$0xff] %v1208
        %1225 = vst [vmem:[#allocation5 + $0x48] sm:$0xff] %v1209
        %1226 = vst [vmem:[#allocation5 + $0x50] sm:$0xff] %v1210
        %1227 = vst [vmem:[#allocation5 + $0x58] sm:$0xff] %v1211
        %1228 = vst [vmem:[#allocation5 + $0x60] sm:$0xff] %v1212
        %1229 = vst [vmem:[#allocation5 + $0x68] sm:$0xff] %v1213
        %1230 = vst [vmem:[#allocation5 + $0x70] sm:$0xff] %v1214
        %1231 = vst [vmem:[#allocation5 + $0x78] sm:$0xff] %v1215
        %p1232 = scmp.eq.s32.totalorder %s33, 1
        // Predicated region
        $region61: #{tpu_custom_call.1} parent=43 // pred_check
          %p1233 = pneg %p1232
        $region62: #{tpu_custom_call.1} parent=43 // pred_check_branch
          %1235 = sbr.rel (%p1233) target = $region64
        $region63: #{tpu_custom_call.1} parent=43 // pred_region
          %v1236 = vld [vmem:[#allocation3] sm:$0x1]
          %v1237 = vrcp.pop %v1236
          %v1238 = vmul.f32 1.0, %v1237
          %v1239 = vld [vmem:[#allocation4] sm:$0xff]
          %v1240 = vld [vmem:[#allocation4 + $0x8] sm:$0xff]
          %v1241 = vld [vmem:[#allocation4 + $0x10] sm:$0xff]
          %v1242 = vld [vmem:[#allocation4 + $0x18] sm:$0xff]
          %v1243 = vld [vmem:[#allocation4 + $0x20] sm:$0xff]
          %v1244 = vld [vmem:[#allocation4 + $0x28] sm:$0xff]
          %v1245 = vld [vmem:[#allocation4 + $0x30] sm:$0xff]
          %v1246 = vld [vmem:[#allocation4 + $0x38] sm:$0xff]
          %v1247 = vld [vmem:[#allocation4 + $0x40] sm:$0xff]
          %v1248 = vld [vmem:[#allocation4 + $0x48] sm:$0xff]
          %v1249 = vld [vmem:[#allocation4 + $0x50] sm:$0xff]
          %v1250 = vld [vmem:[#allocation4 + $0x58] sm:$0xff]
          %v1251 = vld [vmem:[#allocation4 + $0x60] sm:$0xff]
          %v1252 = vld [vmem:[#allocation4 + $0x68] sm:$0xff]
          %v1253 = vld [vmem:[#allocation4 + $0x70] sm:$0xff]
          %v1254 = vld [vmem:[#allocation4 + $0x78] sm:$0xff]
          %v1256 = vlaneseq
          %v1257 = vshrl.u32 %v1256, 7
          %v1258 = vsub.s32 0, %v1257
          %v1259 = vrot.slane %v1238, %v1258
          %v1261 = vmul.f32 %v1239, %v1259
          %v1262 = vmul.f32 %v1240, %v1259
          %v1263 = vmul.f32 %v1241, %v1259
          %v1264 = vmul.f32 %v1242, %v1259
          %v1265 = vmul.f32 %v1243, %v1259
          %v1266 = vmul.f32 %v1244, %v1259
          %v1267 = vmul.f32 %v1245, %v1259
          %v1268 = vmul.f32 %v1246, %v1259
          %v1269 = vmul.f32 %v1247, %v1259
          %v1270 = vmul.f32 %v1248, %v1259
          %v1271 = vmul.f32 %v1249, %v1259
          %v1272 = vmul.f32 %v1250, %v1259
          %v1273 = vmul.f32 %v1251, %v1259
          %v1274 = vmul.f32 %v1252, %v1259
          %v1275 = vmul.f32 %v1253, %v1259
          %v1276 = vmul.f32 %v1254, %v1259
          %v1277 = vld [vmem:[#allocation5] sm:$0xff]
          %v1278 = vld [vmem:[#allocation5 + $0x8] sm:$0xff]
          %v1279 = vld [vmem:[#allocation5 + $0x10] sm:$0xff]
          %v1280 = vld [vmem:[#allocation5 + $0x18] sm:$0xff]
          %v1281 = vld [vmem:[#allocation5 + $0x20] sm:$0xff]
          %v1282 = vld [vmem:[#allocation5 + $0x28] sm:$0xff]
          %v1283 = vld [vmem:[#allocation5 + $0x30] sm:$0xff]
          %v1284 = vld [vmem:[#allocation5 + $0x38] sm:$0xff]
          %v1285 = vld [vmem:[#allocation5 + $0x40] sm:$0xff]
          %v1286 = vld [vmem:[#allocation5 + $0x48] sm:$0xff]
          %v1287 = vld [vmem:[#allocation5 + $0x50] sm:$0xff]
          %v1288 = vld [vmem:[#allocation5 + $0x58] sm:$0xff]
          %v1289 = vld [vmem:[#allocation5 + $0x60] sm:$0xff]
          %v1290 = vld [vmem:[#allocation5 + $0x68] sm:$0xff]
          %v1291 = vld [vmem:[#allocation5 + $0x70] sm:$0xff]
          %v1292 = vld [vmem:[#allocation5 + $0x78] sm:$0xff]
          %v1293 = vmul.f32 %v1277, %v1259
          %v1294 = vmul.f32 %v1278, %v1259
          %v1295 = vmul.f32 %v1279, %v1259
          %v1296 = vmul.f32 %v1280, %v1259
          %v1297 = vmul.f32 %v1281, %v1259
          %v1298 = vmul.f32 %v1282, %v1259
          %v1299 = vmul.f32 %v1283, %v1259
          %v1300 = vmul.f32 %v1284, %v1259
          %v1301 = vmul.f32 %v1285, %v1259
          %v1302 = vmul.f32 %v1286, %v1259
          %v1303 = vmul.f32 %v1287, %v1259
          %v1304 = vmul.f32 %v1288, %v1259
          %v1305 = vmul.f32 %v1289, %v1259
          %v1306 = vmul.f32 %v1290, %v1259
          %v1307 = vmul.f32 %v1291, %v1259
          %v1308 = vmul.f32 %v1292, %v1259
          %v1309 = vmul.f32 %v1261, %v1261
          %v1310 = vmul.f32 %v1262, %v1262
          %v1311 = vmul.f32 %v1263, %v1263
          %v1312 = vmul.f32 %v1264, %v1264
          %v1313 = vmul.f32 %v1265, %v1265
          %v1314 = vmul.f32 %v1266, %v1266
          %v1315 = vmul.f32 %v1267, %v1267
          %v1316 = vmul.f32 %v1268, %v1268
          %v1317 = vmul.f32 %v1269, %v1269
          %v1318 = vmul.f32 %v1270, %v1270
          %v1319 = vmul.f32 %v1271, %v1271
          %v1320 = vmul.f32 %v1272, %v1272
          %v1321 = vmul.f32 %v1273, %v1273
          %v1322 = vmul.f32 %v1274, %v1274
          %v1323 = vmul.f32 %v1275, %v1275
          %v1324 = vmul.f32 %v1276, %v1276
          %v1325 = vsub.f32 %v1293, %v1309
          %v1326 = vsub.f32 %v1294, %v1310
          %v1327 = vsub.f32 %v1295, %v1311
          %v1328 = vsub.f32 %v1296, %v1312
          %v1329 = vsub.f32 %v1297, %v1313
          %v1330 = vsub.f32 %v1298, %v1314
          %v1331 = vsub.f32 %v1299, %v1315
          %v1332 = vsub.f32 %v1300, %v1316
          %v1333 = vsub.f32 %v1301, %v1317
          %v1334 = vsub.f32 %v1302, %v1318
          %v1335 = vsub.f32 %v1303, %v1319
          %v1336 = vsub.f32 %v1304, %v1320
          %v1337 = vsub.f32 %v1305, %v1321
          %v1338 = vsub.f32 %v1306, %v1322
          %v1339 = vsub.f32 %v1307, %v1323
          %v1340 = vsub.f32 %v1308, %v1324
          %v1341 = vmax.f32 %v1325, 0.0
          %v1342 = vmax.f32 %v1326, 0.0
          %v1343 = vmax.f32 %v1327, 0.0
          %v1344 = vmax.f32 %v1328, 0.0
          %v1345 = vmax.f32 %v1329, 0.0
          %v1346 = vmax.f32 %v1330, 0.0
          %v1347 = vmax.f32 %v1331, 0.0
          %v1348 = vmax.f32 %v1332, 0.0
          %v1349 = vmax.f32 %v1333, 0.0
          %v1350 = vmax.f32 %v1334, 0.0
          %v1351 = vmax.f32 %v1335, 0.0
          %v1352 = vmax.f32 %v1336, 0.0
          %v1353 = vmax.f32 %v1337, 0.0
          %v1354 = vmax.f32 %v1338, 0.0
          %v1355 = vmax.f32 %v1339, 0.0
          %v1356 = vmax.f32 %v1340, 0.0
          %v1357 = vrsqrt.pop %v1341
          %v1358 = vmul.f32 %v1341, %v1357
          %vm1359 = vcmp.eq.f32.partialorder %v1341, inf
          %v1360 = vsel %vm1359, %v1341, %v1358
          %vm1361 = vcmp.eq.f32.partialorder %v1341, 0.0
          %v1362 = vand.u32 %v1341, 2147483648
          %v1363 = vsel %vm1361, %v1362, %v1360
          %v1364 = vrsqrt.pop %v1342
          %v1365 = vmul.f32 %v1342, %v1364
          %vm1366 = vcmp.eq.f32.partialorder %v1342, inf
          %v1367 = vsel %vm1366, %v1342, %v1365
          %vm1368 = vcmp.eq.f32.partialorder %v1342, 0.0
          %v1369 = vand.u32 %v1342, 2147483648
          %v1370 = vsel %vm1368, %v1369, %v1367
          %v1371 = vrsqrt.pop %v1343
          %v1372 = vmul.f32 %v1343, %v1371
          %vm1373 = vcmp.eq.f32.partialorder %v1343, inf
          %v1374 = vsel %vm1373, %v1343, %v1372
          %vm1375 = vcmp.eq.f32.partialorder %v1343, 0.0
          %v1376 = vand.u32 %v1343, 2147483648
          %v1377 = vsel %vm1375, %v1376, %v1374
          %v1378 = vrsqrt.pop %v1344
          %v1379 = vmul.f32 %v1344, %v1378
          %vm1380 = vcmp.eq.f32.partialorder %v1344, inf
          %v1381 = vsel %vm1380, %v1344, %v1379
          %vm1382 = vcmp.eq.f32.partialorder %v1344, 0.0
          %v1383 = vand.u32 %v1344, 2147483648
          %v1384 = vsel %vm1382, %v1383, %v1381
          %v1385 = vrsqrt.pop %v1345
          %v1386 = vmul.f32 %v1345, %v1385
          %vm1387 = vcmp.eq.f32.partialorder %v1345, inf
          %v1388 = vsel %vm1387, %v1345, %v1386
          %vm1389 = vcmp.eq.f32.partialorder %v1345, 0.0
          %v1390 = vand.u32 %v1345, 2147483648
          %v1391 = vsel %vm1389, %v1390, %v1388
          %v1392 = vrsqrt.pop %v1346
          %v1393 = vmul.f32 %v1346, %v1392
          %vm1394 = vcmp.eq.f32.partialorder %v1346, inf
          %v1395 = vsel %vm1394, %v1346, %v1393
          %vm1396 = vcmp.eq.f32.partialorder %v1346, 0.0
          %v1397 = vand.u32 %v1346, 2147483648
          %v1398 = vsel %vm1396, %v1397, %v1395
          %v1399 = vrsqrt.pop %v1347
          %v1400 = vmul.f32 %v1347, %v1399
          %vm1401 = vcmp.eq.f32.partialorder %v1347, inf
          %v1402 = vsel %vm1401, %v1347, %v1400
          %vm1403 = vcmp.eq.f32.partialorder %v1347, 0.0
          %v1404 = vand.u32 %v1347, 2147483648
          %v1405 = vsel %vm1403, %v1404, %v1402
          %v1406 = vrsqrt.pop %v1348
          %v1407 = vmul.f32 %v1348, %v1406
          %vm1408 = vcmp.eq.f32.partialorder %v1348, inf
          %v1409 = vsel %vm1408, %v1348, %v1407
          %vm1410 = vcmp.eq.f32.partialorder %v1348, 0.0
          %v1411 = vand.u32 %v1348, 2147483648
          %v1412 = vsel %vm1410, %v1411, %v1409
          %v1413 = vrsqrt.pop %v1349
          %v1414 = vmul.f32 %v1349, %v1413
          %vm1415 = vcmp.eq.f32.partialorder %v1349, inf
          %v1416 = vsel %vm1415, %v1349, %v1414
          %vm1417 = vcmp.eq.f32.partialorder %v1349, 0.0
          %v1418 = vand.u32 %v1349, 2147483648
          %v1419 = vsel %vm1417, %v1418, %v1416
          %v1420 = vrsqrt.pop %v1350
          %v1421 = vmul.f32 %v1350, %v1420
          %vm1422 = vcmp.eq.f32.partialorder %v1350, inf
          %v1423 = vsel %vm1422, %v1350, %v1421
          %vm1424 = vcmp.eq.f32.partialorder %v1350, 0.0
          %v1425 = vand.u32 %v1350, 2147483648
          %v1426 = vsel %vm1424, %v1425, %v1423
          %v1427 = vrsqrt.pop %v1351
          %v1428 = vmul.f32 %v1351, %v1427
          %vm1429 = vcmp.eq.f32.partialorder %v1351, inf
          %v1430 = vsel %vm1429, %v1351, %v1428
          %vm1431 = vcmp.eq.f32.partialorder %v1351, 0.0
          %v1432 = vand.u32 %v1351, 2147483648
          %v1433 = vsel %vm1431, %v1432, %v1430
          %v1434 = vrsqrt.pop %v1352
          %v1435 = vmul.f32 %v1352, %v1434
          %vm1436 = vcmp.eq.f32.partialorder %v1352, inf
          %v1437 = vsel %vm1436, %v1352, %v1435
          %vm1438 = vcmp.eq.f32.partialorder %v1352, 0.0
          %v1439 = vand.u32 %v1352, 2147483648
          %v1440 = vsel %vm1438, %v1439, %v1437
          %v1441 = vrsqrt.pop %v1353
          %v1442 = vmul.f32 %v1353, %v1441
          %vm1443 = vcmp.eq.f32.partialorder %v1353, inf
          %v1444 = vsel %vm1443, %v1353, %v1442
          %vm1445 = vcmp.eq.f32.partialorder %v1353, 0.0
          %v1446 = vand.u32 %v1353, 2147483648
          %v1447 = vsel %vm1445, %v1446, %v1444
          %v1448 = vrsqrt.pop %v1354
          %v1449 = vmul.f32 %v1354, %v1448
          %vm1450 = vcmp.eq.f32.partialorder %v1354, inf
          %v1451 = vsel %vm1450, %v1354, %v1449
          %vm1452 = vcmp.eq.f32.partialorder %v1354, 0.0
          %v1453 = vand.u32 %v1354, 2147483648
          %v1454 = vsel %vm1452, %v1453, %v1451
          %v1455 = vrsqrt.pop %v1355
          %v1456 = vmul.f32 %v1355, %v1455
          %vm1457 = vcmp.eq.f32.partialorder %v1355, inf
          %v1458 = vsel %vm1457, %v1355, %v1456
          %vm1459 = vcmp.eq.f32.partialorder %v1355, 0.0
          %v1460 = vand.u32 %v1355, 2147483648
          %v1461 = vsel %vm1459, %v1460, %v1458
          %v1462 = vrsqrt.pop %v1356
          %v1463 = vmul.f32 %v1356, %v1462
          %vm1464 = vcmp.eq.f32.partialorder %v1356, inf
          %v1465 = vsel %vm1464, %v1356, %v1463
          %vm1466 = vcmp.eq.f32.partialorder %v1356, 0.0
          %v1467 = vand.u32 %v1356, 2147483648
          %v1468 = vsel %vm1466, %v1467, %v1465
          %v1469 = vld [vmem:[%s376] sm:$0xff]
          %v1470 = vld [vmem:[%s376 + $0x8] sm:$0xff]
          %v1471 = vld [vmem:[%s376 + $0x10] sm:$0xff]
          %v1472 = vld [vmem:[%s376 + $0x18] sm:$0xff]
          %v1473 = vld [vmem:[%s376 + $0x20] sm:$0xff]
          %v1474 = vld [vmem:[%s376 + $0x28] sm:$0xff]
          %v1475 = vld [vmem:[%s376 + $0x30] sm:$0xff]
          %v1476 = vld [vmem:[%s376 + $0x38] sm:$0xff]
          %v1477 = vld [vmem:[%s376 + $0x40] sm:$0xff]
          %v1478 = vld [vmem:[%s376 + $0x48] sm:$0xff]
          %v1479 = vld [vmem:[%s376 + $0x50] sm:$0xff]
          %v1480 = vld [vmem:[%s376 + $0x58] sm:$0xff]
          %v1481 = vld [vmem:[%s376 + $0x60] sm:$0xff]
          %v1482 = vld [vmem:[%s376 + $0x68] sm:$0xff]
          %v1483 = vld [vmem:[%s376 + $0x70] sm:$0xff]
          %v1484 = vld [vmem:[%s376 + $0x78] sm:$0xff]
          %v1485 = vld [vmem:[%s449] sm:$0xff]
          %v1486 = vld [vmem:[%s449 + $0x8] sm:$0xff]
          %v1487 = vld [vmem:[%s449 + $0x10] sm:$0xff]
          %v1488 = vld [vmem:[%s449 + $0x18] sm:$0xff]
          %v1489 = vld [vmem:[%s449 + $0x20] sm:$0xff]
          %v1490 = vld [vmem:[%s449 + $0x28] sm:$0xff]
          %v1491 = vld [vmem:[%s449 + $0x30] sm:$0xff]
          %v1492 = vld [vmem:[%s449 + $0x38] sm:$0xff]
          %v1493 = vld [vmem:[%s449 + $0x40] sm:$0xff]
          %v1494 = vld [vmem:[%s449 + $0x48] sm:$0xff]
          %v1495 = vld [vmem:[%s449 + $0x50] sm:$0xff]
          %v1496 = vld [vmem:[%s449 + $0x58] sm:$0xff]
          %v1497 = vld [vmem:[%s449 + $0x60] sm:$0xff]
          %v1498 = vld [vmem:[%s449 + $0x68] sm:$0xff]
          %v1499 = vld [vmem:[%s449 + $0x70] sm:$0xff]
          %v1500 = vld [vmem:[%s449 + $0x78] sm:$0xff]
          %1502 = vset.pattern.permute.xlu0 0
          %1503 = vperm.xlu0 %1502, %v1485
          %v1504 = vpop.permute.xlu0 %1503
          %1507 = vset.pattern.permute.xlu0 0
          %1508 = vperm.xlu0 %1507, %v1486
          %v1509 = vpop.permute.xlu0 %1508
          %1512 = vset.pattern.permute.xlu0 0
          %1513 = vperm.xlu0 %1512, %v1487
          %v1514 = vpop.permute.xlu0 %1513
          %1517 = vset.pattern.permute.xlu0 0
          %1518 = vperm.xlu0 %1517, %v1488
          %v1519 = vpop.permute.xlu0 %1518
          %1522 = vset.pattern.permute.xlu0 0
          %1523 = vperm.xlu0 %1522, %v1489
          %v1524 = vpop.permute.xlu0 %1523
          %1527 = vset.pattern.permute.xlu0 0
          %1528 = vperm.xlu0 %1527, %v1490
          %v1529 = vpop.permute.xlu0 %1528
          %1532 = vset.pattern.permute.xlu0 0
          %1533 = vperm.xlu0 %1532, %v1491
          %v1534 = vpop.permute.xlu0 %1533
          %1537 = vset.pattern.permute.xlu0 0
          %1538 = vperm.xlu0 %1537, %v1492
          %v1539 = vpop.permute.xlu0 %1538
          %1542 = vset.pattern.permute.xlu0 0
          %1543 = vperm.xlu0 %1542, %v1493
          %v1544 = vpop.permute.xlu0 %1543
          %1547 = vset.pattern.permute.xlu0 0
          %1548 = vperm.xlu0 %1547, %v1494
          %v1549 = vpop.permute.xlu0 %1548
          %1552 = vset.pattern.permute.xlu0 0
          %1553 = vperm.xlu0 %1552, %v1495
          %v1554 = vpop.permute.xlu0 %1553
          %1557 = vset.pattern.permute.xlu0 0
          %1558 = vperm.xlu0 %1557, %v1496
          %v1559 = vpop.permute.xlu0 %1558
          %1562 = vset.pattern.permute.xlu0 0
          %1563 = vperm.xlu0 %1562, %v1497
          %v1564 = vpop.permute.xlu0 %1563
          %1567 = vset.pattern.permute.xlu0 0
          %1568 = vperm.xlu0 %1567, %v1498
          %v1569 = vpop.permute.xlu0 %1568
          %1572 = vset.pattern.permute.xlu0 0
          %1573 = vperm.xlu0 %1572, %v1499
          %v1574 = vpop.permute.xlu0 %1573
          %1577 = vset.pattern.permute.xlu0 0
          %1578 = vperm.xlu0 %1577, %v1500
          %v1579 = vpop.permute.xlu0 %1578
          %v1581 = vsub.f32 %v1469, %v1504
          %v1582 = vsub.f32 %v1470, %v1509
          %v1583 = vsub.f32 %v1471, %v1514
          %v1584 = vsub.f32 %v1472, %v1519
          %v1585 = vsub.f32 %v1473, %v1524
          %v1586 = vsub.f32 %v1474, %v1529
          %v1587 = vsub.f32 %v1475, %v1534
          %v1588 = vsub.f32 %v1476, %v1539
          %v1589 = vsub.f32 %v1477, %v1544
          %v1590 = vsub.f32 %v1478, %v1549
          %v1591 = vsub.f32 %v1479, %v1554
          %v1592 = vsub.f32 %v1480, %v1559
          %v1593 = vsub.f32 %v1481, %v1564
          %v1594 = vsub.f32 %v1482, %v1569
          %v1595 = vsub.f32 %v1483, %v1574
          %v1596 = vsub.f32 %v1484, %v1579
          %v1597 = vld [vmem:[%s454] sm:$0xff]
          %v1598 = vld [vmem:[%s454 + $0x8] sm:$0xff]
          %v1599 = vld [vmem:[%s454 + $0x10] sm:$0xff]
          %v1600 = vld [vmem:[%s454 + $0x18] sm:$0xff]
          %v1601 = vld [vmem:[%s454 + $0x20] sm:$0xff]
          %v1602 = vld [vmem:[%s454 + $0x28] sm:$0xff]
          %v1603 = vld [vmem:[%s454 + $0x30] sm:$0xff]
          %v1604 = vld [vmem:[%s454 + $0x38] sm:$0xff]
          %v1605 = vld [vmem:[%s454 + $0x40] sm:$0xff]
          %v1606 = vld [vmem:[%s454 + $0x48] sm:$0xff]
          %v1607 = vld [vmem:[%s454 + $0x50] sm:$0xff]
          %v1608 = vld [vmem:[%s454 + $0x58] sm:$0xff]
          %v1609 = vld [vmem:[%s454 + $0x60] sm:$0xff]
          %v1610 = vld [vmem:[%s454 + $0x68] sm:$0xff]
          %v1611 = vld [vmem:[%s454 + $0x70] sm:$0xff]
          %v1612 = vld [vmem:[%s454 + $0x78] sm:$0xff]
          %1614 = vset.pattern.permute.xlu0 0
          %1615 = vperm.xlu0 %1614, %v1597
          %v1616 = vpop.permute.xlu0 %1615
          %1619 = vset.pattern.permute.xlu0 0
          %1620 = vperm.xlu0 %1619, %v1598
          %v1621 = vpop.permute.xlu0 %1620
          %1624 = vset.pattern.permute.xlu0 0
          %1625 = vperm.xlu0 %1624, %v1599
          %v1626 = vpop.permute.xlu0 %1625
          %1629 = vset.pattern.permute.xlu0 0
          %1630 = vperm.xlu0 %1629, %v1600
          %v1631 = vpop.permute.xlu0 %1630
          %1634 = vset.pattern.permute.xlu0 0
          %1635 = vperm.xlu0 %1634, %v1601
          %v1636 = vpop.permute.xlu0 %1635
          %1639 = vset.pattern.permute.xlu0 0
          %1640 = vperm.xlu0 %1639, %v1602
          %v1641 = vpop.permute.xlu0 %1640
          %1644 = vset.pattern.permute.xlu0 0
          %1645 = vperm.xlu0 %1644, %v1603
          %v1646 = vpop.permute.xlu0 %1645
          %1649 = vset.pattern.permute.xlu0 0
          %1650 = vperm.xlu0 %1649, %v1604
          %v1651 = vpop.permute.xlu0 %1650
          %1654 = vset.pattern.permute.xlu0 0
          %1655 = vperm.xlu0 %1654, %v1605
          %v1656 = vpop.permute.xlu0 %1655
          %1659 = vset.pattern.permute.xlu0 0
          %1660 = vperm.xlu0 %1659, %v1606
          %v1661 = vpop.permute.xlu0 %1660
          %1664 = vset.pattern.permute.xlu0 0
          %1665 = vperm.xlu0 %1664, %v1607
          %v1666 = vpop.permute.xlu0 %1665
          %1669 = vset.pattern.permute.xlu0 0
          %1670 = vperm.xlu0 %1669, %v1608
          %v1671 = vpop.permute.xlu0 %1670
          %1674 = vset.pattern.permute.xlu0 0
          %1675 = vperm.xlu0 %1674, %v1609
          %v1676 = vpop.permute.xlu0 %1675
          %1679 = vset.pattern.permute.xlu0 0
          %1680 = vperm.xlu0 %1679, %v1610
          %v1681 = vpop.permute.xlu0 %1680
          %1684 = vset.pattern.permute.xlu0 0
          %1685 = vperm.xlu0 %1684, %v1611
          %v1686 = vpop.permute.xlu0 %1685
          %1689 = vset.pattern.permute.xlu0 0
          %1690 = vperm.xlu0 %1689, %v1612
          %v1691 = vpop.permute.xlu0 %1690
          %v1693 = vmul.f32 %v1581, %v1616
          %v1694 = vmul.f32 %v1582, %v1621
          %v1695 = vmul.f32 %v1583, %v1626
          %v1696 = vmul.f32 %v1584, %v1631
          %v1697 = vmul.f32 %v1585, %v1636
          %v1698 = vmul.f32 %v1586, %v1641
          %v1699 = vmul.f32 %v1587, %v1646
          %v1700 = vmul.f32 %v1588, %v1651
          %v1701 = vmul.f32 %v1589, %v1656
          %v1702 = vmul.f32 %v1590, %v1661
          %v1703 = vmul.f32 %v1591, %v1666
          %v1704 = vmul.f32 %v1592, %v1671
          %v1705 = vmul.f32 %v1593, %v1676
          %v1706 = vmul.f32 %v1594, %v1681
          %v1707 = vmul.f32 %v1595, %v1686
          %v1708 = vmul.f32 %v1596, %v1691
          %v1709 = vmul.f32 %v1363, %v1693
          %v1710 = vmul.f32 %v1370, %v1694
          %v1711 = vmul.f32 %v1377, %v1695
          %v1712 = vmul.f32 %v1384, %v1696
          %v1713 = vmul.f32 %v1391, %v1697
          %v1714 = vmul.f32 %v1398, %v1698
          %v1715 = vmul.f32 %v1405, %v1699
          %v1716 = vmul.f32 %v1412, %v1700
          %v1717 = vmul.f32 %v1419, %v1701
          %v1718 = vmul.f32 %v1426, %v1702
          %v1719 = vmul.f32 %v1433, %v1703
          %v1720 = vmul.f32 %v1440, %v1704
          %v1721 = vmul.f32 %v1447, %v1705
          %v1722 = vmul.f32 %v1454, %v1706
          %v1723 = vmul.f32 %v1461, %v1707
          %v1724 = vmul.f32 %v1468, %v1708
          %v1725 = vadd.f32 %v1709, %v1261
          %v1726 = vadd.f32 %v1710, %v1262
          %v1727 = vadd.f32 %v1711, %v1263
          %v1728 = vadd.f32 %v1712, %v1264
          %v1729 = vadd.f32 %v1713, %v1265
          %v1730 = vadd.f32 %v1714, %v1266
          %v1731 = vadd.f32 %v1715, %v1267
          %v1732 = vadd.f32 %v1716, %v1268
          %v1733 = vadd.f32 %v1717, %v1269
          %v1734 = vadd.f32 %v1718, %v1270
          %v1735 = vadd.f32 %v1719, %v1271
          %v1736 = vadd.f32 %v1720, %v1272
          %v1737 = vadd.f32 %v1721, %v1273
          %v1738 = vadd.f32 %v1722, %v1274
          %v1739 = vadd.f32 %v1723, %v1275
          %v1740 = vadd.f32 %v1724, %v1276
          %1741 = vst [vmem:[%s433] sm:$0xff] %v1725
          %1742 = vst [vmem:[%s433 + $0x8] sm:$0xff] %v1726
          %1743 = vst [vmem:[%s433 + $0x10] sm:$0xff] %v1727
          %1744 = vst [vmem:[%s433 + $0x18] sm:$0xff] %v1728
          %1745 = vst [vmem:[%s433 + $0x20] sm:$0xff] %v1729
          %1746 = vst [vmem:[%s433 + $0x28] sm:$0xff] %v1730
          %1747 = vst [vmem:[%s433 + $0x30] sm:$0xff] %v1731
          %1748 = vst [vmem:[%s433 + $0x38] sm:$0xff] %v1732
          %1749 = vst [vmem:[%s433 + $0x40] sm:$0xff] %v1733
          %1750 = vst [vmem:[%s433 + $0x48] sm:$0xff] %v1734
          %1751 = vst [vmem:[%s433 + $0x50] sm:$0xff] %v1735
          %1752 = vst [vmem:[%s433 + $0x58] sm:$0xff] %v1736
          %1753 = vst [vmem:[%s433 + $0x60] sm:$0xff] %v1737
          %1754 = vst [vmem:[%s433 + $0x68] sm:$0xff] %v1738
          %1755 = vst [vmem:[%s433 + $0x70] sm:$0xff] %v1739
          %1756 = vst [vmem:[%s433 + $0x78] sm:$0xff] %v1740
        $region64: #{tpu_custom_call.1} parent=43 // pred_fallthru
          _
        %s1757 = sand.u32 %s219, 1
        %s1758 = scalar_lea.sflag [#allocation8], %s1757
        %s1759 = sand.u32 %s219, 1
        %s1760 = smul.addr %s1759, 128
        %s1761 = scalar_lea.vmem [#allocation12], %s1760
        // Predicated region
        $region65: #{tpu_custom_call.1} parent=43 // pred_check
          %p1762 = pneg %p229
        $region66: #{tpu_custom_call.1} parent=43 // pred_check_branch
          %1764 = sbr.rel (%p1762) target = $region68
        $region67: #{tpu_custom_call.1} parent=43 // pred_region
          %s1766 = ssub.s32 2048, 2048
          %1767 = vsyncadd %s1758, %s1766
          %s1768 = smul.addr %s31, 32
          %s1769 = sadd.s32 %s32, %s1768
          %s1770 = smul.addr %s1769, 128
          %s1771 = scalar_lea.hbm %s6, %s1770
          %s1772 = sshll.u32 %s1761, 4
          %s1773 = int_to_ptr.vmem [resolvable:$true] %s1772
          %1778 = dma.vmem_to_hbm [thread:$0]  %s1773, 2048, %s1771, %s1758, 128, 256, 8
        $region68: #{tpu_custom_call.1} parent=43 // pred_fallthru
          _
      $region44: #{tpu_custom_call.1} parent=5 // pred_fallthru
        _
      %p1779 = scmp.le.s32.totalorder 2, %s21
      // Predicated region
      $region69: #{tpu_custom_call.1} parent=5 // pred_check
        %p1780 = pneg %p1779
      $region70: #{tpu_custom_call.1} parent=5 // pred_check_branch
        %1782 = sbr.rel (%p1780) target = $region72
      $region71: #{tpu_custom_call.1} parent=5 // pred_region
        %s1783 = ssub.s32 %s21, 2
        // Predicated region
        $region73: #{tpu_custom_call.1} parent=71 // pred_check
          %p1784 = pneg %p235
        $region74: #{tpu_custom_call.1} parent=71 // pred_check_branch
          %1786 = sbr.rel (%p1784) target = $region76
        $region75: #{tpu_custom_call.1} parent=71 // pred_region
          %s1787 = sand.u32 %s220, 1
          %s1788 = scalar_lea.sflag [#allocation8], %s1787
          %s1789 = sand.u32 %s220, 1
          %s1790 = smul.addr %s1789, 128
          %s1791 = scalar_lea.vmem [#allocation12], %s1790
          %1792 = dma.done %s1788, 2048
        $region76: #{tpu_custom_call.1} parent=71 // pred_fallthru
          _
      $region72: #{tpu_custom_call.1} parent=5 // pred_fallthru
        _
    $region6: #{tpu_custom_call.1} parent=1 // loop_footer
      %s25 = sadd.s32 1, %s21
    $region7: #{tpu_custom_call.1} parent=1 // loop_footer_branch
      %20 = sbr.rel target = $region3
    $region8: #{tpu_custom_call.1} parent=1 // loop_exit
      _
    %1793 = vsyncpa [#allocation7], 1
    %s1794 = scalar_lea.sflag [#allocation7], 1
    %1795 = vsyncpa %s1794, 1
    %1796 = vsyncpa [#allocation10], 1
    %s1797 = scalar_lea.sflag [#allocation10], 1
    %1798 = vsyncpa %s1797, 1
    %1799 = vsyncpa [#allocation8], 1
    %s1800 = scalar_lea.sflag [#allocation8], 1
    %1801 = vsyncpa %s1800, 1

</llo_original>
